<compile_context>
chip_gen: v7x
topology: tpu7x:2x2x1
jax: 0.10.0
libtpu: 0.0.40
codegen_flags: <defaults>
</compile_context>

<pallas_src>
import functools

import jax
import jax.numpy as jnp
import numpy as np
from jax.experimental import pallas as pl
from jax.experimental.pallas import tpu as pltpu


# ----------------------------------------------------------------------------
# Pallas kernel: fused QtranQAlt forward over one (TILE_M, D_in) row tile
# ----------------------------------------------------------------------------
def qtran_qalt_kernel(
    x_ref,
    wh1_ref, bh1_ref, wh2_ref, bh2_ref,
    wa1_ref, ba1_ref, wa2_ref, ba2_ref,
    wq1s_ref, wq1h_ref, wq1a_ref, bq1_ref,
    wq2_ref, bq2_ref, wq3_ref, bq3_ref,
    out_ref,
    *, hid_width,
):
    f32 = jnp.float32
    # Activation slab, agents packed along lanes: [hidden(A*H) | state(A*S) | actions(A*na)]
    x = x_ref[...].astype(f32)                      # (TILE_M, D_in), bf16 -> f32
    xh = x[:, :hid_width]                           # (TILE_M, A*H), offset-0 lane slice

    # Hidden encoder: 2 block-diagonal dots cover all agents at once.
    g = jnp.maximum(jnp.dot(xh, wh1_ref[...], preferred_element_type=f32) + bh1_ref[...], 0.0)
    he = jnp.dot(g, wh2_ref[...], preferred_element_type=f32) + bh2_ref[...]     # (TILE_M, A*H)

    # Action encoder: layer-1 weight is zero-row-padded to the full slab width, so the
    # action lanes are selected by the matmul itself (no unaligned lane slicing of x).
    a1 = jnp.maximum(jnp.dot(x, wa1_ref[...], preferred_element_type=f32) + ba1_ref[...], 0.0)
    ae = jnp.dot(a1, wa2_ref[...], preferred_element_type=f32) + ba2_ref[...]    # (TILE_M, A*na)

    # Q head layer 1, fused over agents:
    #   state part  : zero-row-padded full-width weight (selects the state lanes)
    #   hidden part : kron(ones(A,A), wq1h)  ==  sum over ALL agents' hidden encodings
    #   action part : kron(1-eye(A), wq1a)   ==  sum over the OTHER agents' action encodings
    h1 = (jnp.dot(x, wq1s_ref[...], preferred_element_type=f32)
          + jnp.dot(he, wq1h_ref[...], preferred_element_type=f32)
          + jnp.dot(ae, wq1a_ref[...], preferred_element_type=f32)
          + bq1_ref[...])
    h1 = jnp.maximum(h1, 0.0)
    h2 = jnp.maximum(jnp.dot(h1, wq2_ref[...], preferred_element_type=f32) + bq2_ref[...], 0.0)
    q = jnp.dot(h2, wq3_ref[...], preferred_element_type=f32) + bq3_ref[...]     # (TILE_M, A*na)
    out_ref[...] = q.astype(out_ref.dtype)


def _round_up(x, m):
    return ((x + m - 1) // m) * m


def _choose_tile_m(m, row_align):
    """Row-tile: >=2 grid steps whenever possible (v7x has 2 TCs), low padding waste."""
    m_al = _round_up(m, row_align)
    if m_al <= 2 * row_align:
        return row_align
    if m_al < 256:
        # Small problem: split into two row tiles so both v7x TensorCores get work.
        return _round_up(-(-m_al // 2), row_align)
    for t in (512, 256, 128):
        steps = -(-m_al // t)
        if steps >= 2 and (steps * t - m) * 8 <= m:      # <= 12.5% padding waste
            return t
    return 128


# ----------------------------------------------------------------------------
# Wrapper
# ----------------------------------------------------------------------------
@functools.partial(jax.jit, static_argnames=("n_agents",))
def qtran_qalt_forward(state, hidden_states, actions, params, n_agents):
    E, T, A, n_actions = actions.shape
    assert A == n_agents
    H = hidden_states.shape[-1]
    S = state.shape[-1]
    Qh = params["wq2"].shape[0]
    M = E * T
    D_in = A * (H + S + n_actions)
    N_OUT = A * n_actions

    act_dtype = jnp.bfloat16          # HBM storage for activations; in-kernel math is f32
    act_itemsize = 2

    off_sta = A * H                   # slab layout: [hidden | state | actions]
    off_act = A * (H + S)

    # Activation slab: natural reshapes (agent-major within a row) + one concat. No transpose.
    x_all = jnp.concatenate(
        [hidden_states.reshape(M, A * H),
         state.reshape(M, A * S),
         actions.reshape(M, A * n_actions)],
        axis=-1,
    ).astype(act_dtype)

    row_align = 16 if act_dtype == jnp.bfloat16 else 8
    TILE_M = _choose_tile_m(M, row_align)
    M_pad = _round_up(M, TILE_M)
    if M_pad != M:
        x_all = jnp.pad(x_all, ((0, M_pad - M), (0, 0)))
    grid = (M_pad // TILE_M,)

    # --- agent-fused weights (tiny; built once per jit, VMEM-resident in the kernel) ---
    f32 = jnp.float32
    eyeA = jnp.eye(A, dtype=f32)
    onesA = jnp.ones((A, A), dtype=f32)

    def bd(w):                         # block-diagonal over agents
        return jnp.kron(eyeA, w.astype(f32))

    def rep_bias(b):                   # tile a (1, F) bias across agents -> (1, A*F)
        return jnp.tile(b.astype(f32), (1, A))

    def full_width(w_bd, offset):      # zero-pad rows so K == full slab width D_in
        return jnp.pad(w_bd, ((offset, D_in - offset - w_bd.shape[0]), (0, 0)))

    weights = (
        bd(params["wh1"]), rep_bias(params["bh1"]),
        bd(params["wh2"]), rep_bias(params["bh2"]),
        full_width(bd(params["wa1"]), off_act), rep_bias(params["ba1"]),
        bd(params["wa2"]), rep_bias(params["ba2"]),
        full_width(bd(params["wq1s"]), off_sta),
        jnp.kron(onesA, params["wq1h"].astype(f32)),           # sum over all agents
        jnp.kron(onesA - eyeA, params["wq1a"].astype(f32)),    # sum over other agents
        rep_bias(params["bq1"]),
        bd(params["wq2"]), rep_bias(params["bq2"]),
        bd(params["wq3"]), rep_bias(params["bq3"]),
    )

    in_specs = [pl.BlockSpec((TILE_M, D_in), lambda i: (i, 0))]
    in_specs += [pl.BlockSpec(w.shape, lambda i: (0, 0)) for w in weights]   # VMEM-resident
    out_spec = pl.BlockSpec((TILE_M, N_OUT), lambda i: (i, 0))

    dot_kn = ((A * H, A * H), (A * H, A * H),                        # hidden encoder
              (D_in, A * n_actions), (A * n_actions, A * n_actions),  # action encoder
              (D_in, A * Qh), (A * H, A * Qh), (A * n_actions, A * Qh),  # Q head layer 1
              (A * Qh, A * Qh), (A * Qh, A * n_actions))              # Q head layers 2, 3
    cost = pl.CostEstimate(
        flops=int(2 * M_pad * sum(k * n for k, n in dot_kn)),
        transcendentals=0,
        bytes_accessed=int(M_pad * D_in * act_itemsize
                           + M_pad * N_OUT * 4
                           + sum(int(np.prod(w.shape)) for w in weights) * 4),
    )

    out = pl.pallas_call(
        functools.partial(qtran_qalt_kernel, hid_width=A * H),
        out_shape=jax.ShapeDtypeStruct((M_pad, N_OUT), jnp.float32),
        grid=grid,
        in_specs=in_specs,
        out_specs=out_spec,
        compiler_params=pltpu.CompilerParams(
            dimension_semantics=("parallel",),   # independent row tiles -> 2 TCs on v7x
        ),
        cost_estimate=cost,
    )(x_all, *weights)

    return out[:M].reshape(E, T, A, n_actions)


# ----------------------------------------------------------------------------
# Pure-JAX reference mirroring the PyTorch forward exactly
# ----------------------------------------------------------------------------
def qtran_qalt_reference(state, hidden_states, actions, params):
    E, T, A, n_actions = actions.shape
    H = hidden_states.shape[-1]

    def mlp2(x, w1, b1, w2, b2):
        return jnp.maximum(x @ w1 + b1, 0.0) @ w2 + b2

    ae = mlp2(actions.reshape(-1, n_actions), params["wa1"], params["ba1"],
              params["wa2"], params["ba2"]).reshape(E, T, A, n_actions)
    he = mlp2(hidden_states.reshape(-1, H), params["wh1"], params["bh1"],
              params["wh2"], params["bh2"]).reshape(E, T, A, H)

    he_sum = he.sum(axis=-2)                                   # (E,T,H)
    he_exp = jnp.broadcast_to(he_sum[:, :, None, :], (E, T, A, H))

    ae_flat = ae.reshape(E, T, 1, A * n_actions)
    ae_rep = jnp.tile(ae_flat, (1, 1, A, 1))
    mask = 1.0 - jnp.eye(A, dtype=jnp.float32)
    mask = jnp.tile(mask.reshape(-1, 1), (1, n_actions)).reshape(A, -1)
    ae_masked = ae_rep * mask[None, None, :, :]
    ae_others = ae_masked.reshape(E, T, A, A, n_actions).sum(axis=-2)

    inp = jnp.concatenate([state, he_exp, ae_others], axis=-1)
    wq1 = jnp.concatenate([params["wq1s"], params["wq1h"], params["wq1a"]], axis=0)
    h1 = jnp.maximum(inp @ wq1 + params["bq1"], 0.0)
    h2 = jnp.maximum(h1 @ params["wq2"] + params["bq2"], 0.0)
    return h2 @ params["wq3"] + params["bq3"]


# ----------------------------------------------------------------------------
# Deterministic parameter init (PyTorch-Linear-style uniform)
# ----------------------------------------------------------------------------
def init_params(key, n_actions, rnn_hidden, state_dim_total, n_agents, qtran_hidden):
    def linear(k, fan_in, fan_out):
        kw, kb = jax.random.split(k)
        bound = 1.0 / np.sqrt(fan_in)
        w = jax.random.uniform(kw, (fan_in, fan_out), jnp.float32, -bound, bound)
        b = jax.random.uniform(kb, (1, fan_out), jnp.float32, -bound, bound)
        return w, b

    keys = jax.random.split(key, 7)
    params = {}
    params["wa1"], params["ba1"] = linear(keys[0], n_actions, n_actions)
    params["wa2"], params["ba2"] = linear(keys[1], n_actions, n_actions)
    params["wh1"], params["bh1"] = linear(keys[2], rnn_hidden, rnn_hidden)
    params["wh2"], params["bh2"] = linear(keys[3], rnn_hidden, rnn_hidden)

    q_input = state_dim_total + rnn_hidden + n_actions
    wq1, params["bq1"] = linear(keys[4], q_input, qtran_hidden)
    # Split the first Q-head weight by input block (state | hidden | action), matching
    # the torch.cat([state, hidden_encoding, action_encoding], dim=-1) ordering.
    params["wq1s"] = wq1[:state_dim_total]
    params["wq1h"] = wq1[state_dim_total:state_dim_total + rnn_hidden]
    params["wq1a"] = wq1[state_dim_total + rnn_hidden:]
    params["wq2"], params["bq2"] = linear(keys[5], qtran_hidden, qtran_hidden)
    params["wq3"], params["bq3"] = linear(keys[6], qtran_hidden, n_actions)
    return params


if __name__ == "__main__":
    # args
    n_agents = 3
    n_actions = 5
    rnn_hidden_dim = 32
    state_shape = 12
    qtran_hidden_dim = 32
    # M = E*T = 26: not a multiple of TILE_M and grid >= 2, so the multi-step pipeline,
    # the row-padding path, and the "parallel" (megacore) path are all exercised.
    E, T = 2, 13

    state_dim_total = state_shape + n_agents  # state with agent one-hot appended

    key = jax.random.PRNGKey(0)
    k_state, k_hidden, k_actions, k_params = jax.random.split(key, 4)

    state = jax.random.normal(k_state, (E, T, n_agents, state_dim_total), jnp.float32)
    hidden_states = jax.random.normal(k_hidden, (E, T, n_agents, rnn_hidden_dim), jnp.float32)
    actions = jax.random.normal(k_actions, (E, T, n_agents, n_actions), jnp.float32)

    params = init_params(k_params, n_actions, rnn_hidden_dim,
                         state_dim_total, n_agents, qtran_hidden_dim)

    q_tot = qtran_qalt_forward(state, hidden_states, actions, params, n_agents)
    q_tot = jax.block_until_ready(q_tot)

    # Reference on the same bf16-quantised activations the kernel consumes (bf16 HBM
    # storage is a wrapper-side perf choice; all in-kernel math accumulates in f32).
    to_bf16 = lambda a: a.astype(jnp.bfloat16).astype(jnp.float32)
    q_ref = qtran_qalt_reference(to_bf16(state), to_bf16(hidden_states),
                                 to_bf16(actions), params)
    np.testing.assert_allclose(np.asarray(q_tot), np.asarray(q_ref), atol=5e-4, rtol=5e-4)

    print("KERNEL_OK")
</pallas_src>

<mosaic_0001>
module attributes {stable_mosaic.version = 11 : i64} {
  func.func @qtran_qalt_kernel(%arg0: i32, %arg1: memref<16x156xbf16, #tpu.memory_space<vmem>>, %arg2: memref<96x96xf32, #tpu.memory_space<vmem>>, %arg3: memref<1x96xf32, #tpu.memory_space<vmem>>, %arg4: memref<96x96xf32, #tpu.memory_space<vmem>>, %arg5: memref<1x96xf32, #tpu.memory_space<vmem>>, %arg6: memref<156x15xf32, #tpu.memory_space<vmem>>, %arg7: memref<1x15xf32, #tpu.memory_space<vmem>>, %arg8: memref<15x15xf32, #tpu.memory_space<vmem>>, %arg9: memref<1x15xf32, #tpu.memory_space<vmem>>, %arg10: memref<156x96xf32, #tpu.memory_space<vmem>>, %arg11: memref<96x96xf32, #tpu.memory_space<vmem>>, %arg12: memref<15x96xf32, #tpu.memory_space<vmem>>, %arg13: memref<1x96xf32, #tpu.memory_space<vmem>>, %arg14: memref<96x96xf32, #tpu.memory_space<vmem>>, %arg15: memref<1x96xf32, #tpu.memory_space<vmem>>, %arg16: memref<96x15xf32, #tpu.memory_space<vmem>>, %arg17: memref<1x15xf32, #tpu.memory_space<vmem>>, %arg18: memref<16x15xf32, #tpu.memory_space<vmem>>) attributes {dimension_semantics = [#tpu.dimension_semantics<parallel>], iteration_bounds = array<i64: 2>, scalar_prefetch = 0 : i64, scratch_operands = 0 : i64, tpu.core_type = #tpu.core_type<tc>, window_params = [{transform_indices = @transform_0, window_bounds = array<i64: 16, 156>}, {pipeline_mode = #tpu.pipeline_mode<synchronous>, transform_indices = @transform_1, window_bounds = array<i64: 96, 96>}, {pipeline_mode = #tpu.pipeline_mode<synchronous>, transform_indices = @transform_2, window_bounds = array<i64: 1, 96>}, {pipeline_mode = #tpu.pipeline_mode<synchronous>, transform_indices = @transform_3, window_bounds = array<i64: 96, 96>}, {pipeline_mode = #tpu.pipeline_mode<synchronous>, transform_indices = @transform_4, window_bounds = array<i64: 1, 96>}, {pipeline_mode = #tpu.pipeline_mode<synchronous>, transform_indices = @transform_5, window_bounds = array<i64: 156, 15>}, {pipeline_mode = #tpu.pipeline_mode<synchronous>, transform_indices = @transform_6, window_bounds = array<i64: 1, 15>}, {pipeline_mode = #tpu.pipeline_mode<synchronous>, transform_indices = @transform_7, window_bounds = array<i64: 15, 15>}, {pipeline_mode = #tpu.pipeline_mode<synchronous>, transform_indices = @transform_8, window_bounds = array<i64: 1, 15>}, {pipeline_mode = #tpu.pipeline_mode<synchronous>, transform_indices = @transform_9, window_bounds = array<i64: 156, 96>}, {pipeline_mode = #tpu.pipeline_mode<synchronous>, transform_indices = @transform_10, window_bounds = array<i64: 96, 96>}, {pipeline_mode = #tpu.pipeline_mode<synchronous>, transform_indices = @transform_11, window_bounds = array<i64: 15, 96>}, {pipeline_mode = #tpu.pipeline_mode<synchronous>, transform_indices = @transform_12, window_bounds = array<i64: 1, 96>}, {pipeline_mode = #tpu.pipeline_mode<synchronous>, transform_indices = @transform_13, window_bounds = array<i64: 96, 96>}, {pipeline_mode = #tpu.pipeline_mode<synchronous>, transform_indices = @transform_14, window_bounds = array<i64: 1, 96>}, {pipeline_mode = #tpu.pipeline_mode<synchronous>, transform_indices = @transform_15, window_bounds = array<i64: 96, 15>}, {pipeline_mode = #tpu.pipeline_mode<synchronous>, transform_indices = @transform_16, window_bounds = array<i64: 1, 15>}, {transform_indices = @transform_17, window_bounds = array<i64: 16, 15>}]} {
    %c0 = arith.constant 0 : index
    %c0_0 = arith.constant 0 : index
    %0 = vector.load %arg1[%c0, %c0_0] : memref<16x156xbf16, #tpu.memory_space<vmem>>, vector<16x156xbf16>
    %1 = arith.extf %0 : vector<16x156xbf16> to vector<16x156xf32>
    %2 = vector.extract_strided_slice %1 {offsets = [0, 0], sizes = [16, 96], strides = [1, 1]} : vector<16x156xf32> to vector<16x96xf32>
    %c0_1 = arith.constant 0 : index
    %c0_2 = arith.constant 0 : index
    %3 = vector.load %arg2[%c0_1, %c0_2] : memref<96x96xf32, #tpu.memory_space<vmem>>, vector<96x96xf32>
    %cst = arith.constant dense<0.000000e+00> : vector<16x96xf32>
    %4 = tpu.matmul %2, %3, %cst {dimension_numbers = #tpu.dot_dimension_numbers<[1], [0], [0], [1], [0, 0, 1, 1], [], []>} : vector<16x96xf32>, vector<96x96xf32>, vector<16x96xf32> -> vector<16x96xf32>
    %c0_3 = arith.constant 0 : index
    %c0_4 = arith.constant 0 : index
    %5 = vector.load %arg3[%c0_3, %c0_4] : memref<1x96xf32, #tpu.memory_space<vmem>>, vector<1x96xf32>
    %6 = vector.broadcast %5 : vector<1x96xf32> to vector<16x96xf32>
    %7 = arith.addf %4, %6 : vector<16x96xf32>
    %cst_5 = arith.constant 0.000000e+00 : f32
    %8 = vector.broadcast %cst_5 : f32 to vector<16x96xf32>
    %9 = arith.maximumf %7, %8 : vector<16x96xf32>
    %c0_6 = arith.constant 0 : index
    %c0_7 = arith.constant 0 : index
    %10 = vector.load %arg4[%c0_6, %c0_7] : memref<96x96xf32, #tpu.memory_space<vmem>>, vector<96x96xf32>
    %cst_8 = arith.constant dense<0.000000e+00> : vector<16x96xf32>
    %11 = tpu.matmul %9, %10, %cst_8 {dimension_numbers = #tpu.dot_dimension_numbers<[1], [0], [0], [1], [0, 0, 1, 1], [], []>} : vector<16x96xf32>, vector<96x96xf32>, vector<16x96xf32> -> vector<16x96xf32>
    %c0_9 = arith.constant 0 : index
    %c0_10 = arith.constant 0 : index
    %12 = vector.load %arg5[%c0_9, %c0_10] : memref<1x96xf32, #tpu.memory_space<vmem>>, vector<1x96xf32>
    %13 = vector.broadcast %12 : vector<1x96xf32> to vector<16x96xf32>
    %14 = arith.addf %11, %13 : vector<16x96xf32>
    %c0_11 = arith.constant 0 : index
    %c0_12 = arith.constant 0 : index
    %15 = vector.load %arg6[%c0_11, %c0_12] : memref<156x15xf32, #tpu.memory_space<vmem>>, vector<156x15xf32>
    %cst_13 = arith.constant dense<0.000000e+00> : vector<16x15xf32>
    %16 = tpu.matmul %1, %15, %cst_13 {dimension_numbers = #tpu.dot_dimension_numbers<[1], [0], [0], [1], [0, 0, 1, 1], [], []>} : vector<16x156xf32>, vector<156x15xf32>, vector<16x15xf32> -> vector<16x15xf32>
    %c0_14 = arith.constant 0 : index
    %c0_15 = arith.constant 0 : index
    %17 = vector.load %arg7[%c0_14, %c0_15] : memref<1x15xf32, #tpu.memory_space<vmem>>, vector<1x15xf32>
    %18 = vector.broadcast %17 : vector<1x15xf32> to vector<16x15xf32>
    %19 = arith.addf %16, %18 : vector<16x15xf32>
    %cst_16 = arith.constant 0.000000e+00 : f32
    %20 = vector.broadcast %cst_16 : f32 to vector<16x15xf32>
    %21 = arith.maximumf %19, %20 : vector<16x15xf32>
    %c0_17 = arith.constant 0 : index
    %c0_18 = arith.constant 0 : index
    %22 = vector.load %arg8[%c0_17, %c0_18] : memref<15x15xf32, #tpu.memory_space<vmem>>, vector<15x15xf32>
    %cst_19 = arith.constant dense<0.000000e+00> : vector<16x15xf32>
    %23 = tpu.matmul %21, %22, %cst_19 {dimension_numbers = #tpu.dot_dimension_numbers<[1], [0], [0], [1], [0, 0, 1, 1], [], []>} : vector<16x15xf32>, vector<15x15xf32>, vector<16x15xf32> -> vector<16x15xf32>
    %c0_20 = arith.constant 0 : index
    %c0_21 = arith.constant 0 : index
    %24 = vector.load %arg9[%c0_20, %c0_21] : memref<1x15xf32, #tpu.memory_space<vmem>>, vector<1x15xf32>
    %25 = vector.broadcast %24 : vector<1x15xf32> to vector<16x15xf32>
    %26 = arith.addf %23, %25 : vector<16x15xf32>
    %c0_22 = arith.constant 0 : index
    %c0_23 = arith.constant 0 : index
    %27 = vector.load %arg10[%c0_22, %c0_23] : memref<156x96xf32, #tpu.memory_space<vmem>>, vector<156x96xf32>
    %cst_24 = arith.constant dense<0.000000e+00> : vector<16x96xf32>
    %28 = tpu.matmul %1, %27, %cst_24 {dimension_numbers = #tpu.dot_dimension_numbers<[1], [0], [0], [1], [0, 0, 1, 1], [], []>} : vector<16x156xf32>, vector<156x96xf32>, vector<16x96xf32> -> vector<16x96xf32>
    %c0_25 = arith.constant 0 : index
    %c0_26 = arith.constant 0 : index
    %29 = vector.load %arg11[%c0_25, %c0_26] : memref<96x96xf32, #tpu.memory_space<vmem>>, vector<96x96xf32>
    %cst_27 = arith.constant dense<0.000000e+00> : vector<16x96xf32>
    %30 = tpu.matmul %14, %29, %cst_27 {dimension_numbers = #tpu.dot_dimension_numbers<[1], [0], [0], [1], [0, 0, 1, 1], [], []>} : vector<16x96xf32>, vector<96x96xf32>, vector<16x96xf32> -> vector<16x96xf32>
    %31 = arith.addf %28, %30 : vector<16x96xf32>
    %c0_28 = arith.constant 0 : index
    %c0_29 = arith.constant 0 : index
    %32 = vector.load %arg12[%c0_28, %c0_29] : memref<15x96xf32, #tpu.memory_space<vmem>>, vector<15x96xf32>
    %cst_30 = arith.constant dense<0.000000e+00> : vector<16x96xf32>
    %33 = tpu.matmul %26, %32, %cst_30 {dimension_numbers = #tpu.dot_dimension_numbers<[1], [0], [0], [1], [0, 0, 1, 1], [], []>} : vector<16x15xf32>, vector<15x96xf32>, vector<16x96xf32> -> vector<16x96xf32>
    %34 = arith.addf %31, %33 : vector<16x96xf32>
    %c0_31 = arith.constant 0 : index
    %c0_32 = arith.constant 0 : index
    %35 = vector.load %arg13[%c0_31, %c0_32] : memref<1x96xf32, #tpu.memory_space<vmem>>, vector<1x96xf32>
    %36 = vector.broadcast %35 : vector<1x96xf32> to vector<16x96xf32>
    %37 = arith.addf %34, %36 : vector<16x96xf32>
    %cst_33 = arith.constant 0.000000e+00 : f32
    %38 = vector.broadcast %cst_33 : f32 to vector<16x96xf32>
    %39 = arith.maximumf %37, %38 : vector<16x96xf32>
    %c0_34 = arith.constant 0 : index
    %c0_35 = arith.constant 0 : index
    %40 = vector.load %arg14[%c0_34, %c0_35] : memref<96x96xf32, #tpu.memory_space<vmem>>, vector<96x96xf32>
    %cst_36 = arith.constant dense<0.000000e+00> : vector<16x96xf32>
    %41 = tpu.matmul %39, %40, %cst_36 {dimension_numbers = #tpu.dot_dimension_numbers<[1], [0], [0], [1], [0, 0, 1, 1], [], []>} : vector<16x96xf32>, vector<96x96xf32>, vector<16x96xf32> -> vector<16x96xf32>
    %c0_37 = arith.constant 0 : index
    %c0_38 = arith.constant 0 : index
    %42 = vector.load %arg15[%c0_37, %c0_38] : memref<1x96xf32, #tpu.memory_space<vmem>>, vector<1x96xf32>
    %43 = vector.broadcast %42 : vector<1x96xf32> to vector<16x96xf32>
    %44 = arith.addf %41, %43 : vector<16x96xf32>
    %cst_39 = arith.constant 0.000000e+00 : f32
    %45 = vector.broadcast %cst_39 : f32 to vector<16x96xf32>
    %46 = arith.maximumf %44, %45 : vector<16x96xf32>
    %c0_40 = arith.constant 0 : index
    %c0_41 = arith.constant 0 : index
    %47 = vector.load %arg16[%c0_40, %c0_41] : memref<96x15xf32, #tpu.memory_space<vmem>>, vector<96x15xf32>
    %cst_42 = arith.constant dense<0.000000e+00> : vector<16x15xf32>
    %48 = tpu.matmul %46, %47, %cst_42 {dimension_numbers = #tpu.dot_dimension_numbers<[1], [0], [0], [1], [0, 0, 1, 1], [], []>} : vector<16x96xf32>, vector<96x15xf32>, vector<16x15xf32> -> vector<16x15xf32>
    %c0_43 = arith.constant 0 : index
    %c0_44 = arith.constant 0 : index
    %49 = vector.load %arg17[%c0_43, %c0_44] : memref<1x15xf32, #tpu.memory_space<vmem>>, vector<1x15xf32>
    %50 = vector.broadcast %49 : vector<1x15xf32> to vector<16x15xf32>
    %51 = arith.addf %48, %50 : vector<16x15xf32>
    %c0_45 = arith.constant 0 : index
    %c0_46 = arith.constant 0 : index
    %52 = vector.load %arg18[%c0_45, %c0_46] : memref<16x15xf32, #tpu.memory_space<vmem>>, vector<16x15xf32>
    tpu.vector_store %arg18[%c0_45, %c0_46], %51 {strides = array<i32>} : memref<16x15xf32, #tpu.memory_space<vmem>>, vector<16x15xf32>,
    return
  }
  func.func @transform_0(%arg0: i32) -> (i32, i32) {
    %c0_i32 = arith.constant 0 : i32
    %c0_i32_0 = arith.constant 0 : i32
    return %arg0, %c0_i32 : i32, i32
  }
  func.func @transform_1(%arg0: i32) -> (i32, i32) {
    %c0_i32 = arith.constant 0 : i32
    %c0_i32_0 = arith.constant 0 : i32
    %c0_i32_1 = arith.constant 0 : i32
    return %c0_i32, %c0_i32_0 : i32, i32
  }
  func.func @transform_2(%arg0: i32) -> (i32, i32) {
    %c0_i32 = arith.constant 0 : i32
    %c0_i32_0 = arith.constant 0 : i32
    %c0_i32_1 = arith.constant 0 : i32
    return %c0_i32, %c0_i32_0 : i32, i32
  }
  func.func @transform_3(%arg0: i32) -> (i32, i32) {
    %c0_i32 = arith.constant 0 : i32
    %c0_i32_0 = arith.constant 0 : i32
    %c0_i32_1 = arith.constant 0 : i32
    return %c0_i32, %c0_i32_0 : i32, i32
  }
  func.func @transform_4(%arg0: i32) -> (i32, i32) {
    %c0_i32 = arith.constant 0 : i32
    %c0_i32_0 = arith.constant 0 : i32
    %c0_i32_1 = arith.constant 0 : i32
    return %c0_i32, %c0_i32_0 : i32, i32
  }
  func.func @transform_5(%arg0: i32) -> (i32, i32) {
    %c0_i32 = arith.constant 0 : i32
    %c0_i32_0 = arith.constant 0 : i32
    %c0_i32_1 = arith.constant 0 : i32
    return %c0_i32, %c0_i32_0 : i32, i32
  }
  func.func @transform_6(%arg0: i32) -> (i32, i32) {
    %c0_i32 = arith.constant 0 : i32
    %c0_i32_0 = arith.constant 0 : i32
    %c0_i32_1 = arith.constant 0 : i32
    return %c0_i32, %c0_i32_0 : i32, i32
  }
  func.func @transform_7(%arg0: i32) -> (i32, i32) {
    %c0_i32 = arith.constant 0 : i32
    %c0_i32_0 = arith.constant 0 : i32
    %c0_i32_1 = arith.constant 0 : i32
    return %c0_i32, %c0_i32_0 : i32, i32
  }
  func.func @transform_8(%arg0: i32) -> (i32, i32) {
    %c0_i32 = arith.constant 0 : i32
    %c0_i32_0 = arith.constant 0 : i32
    %c0_i32_1 = arith.constant 0 : i32
    return %c0_i32, %c0_i32_0 : i32, i32
  }
  func.func @transform_9(%arg0: i32) -> (i32, i32) {
    %c0_i32 = arith.constant 0 : i32
    %c0_i32_0 = arith.constant 0 : i32
    %c0_i32_1 = arith.constant 0 : i32
    return %c0_i32, %c0_i32_0 : i32, i32
  }
  func.func @transform_10(%arg0: i32) -> (i32, i32) {
    %c0_i32 = arith.constant 0 : i32
    %c0_i32_0 = arith.constant 0 : i32
    %c0_i32_1 = arith.constant 0 : i32
    return %c0_i32, %c0_i32_0 : i32, i32
  }
  func.func @transform_11(%arg0: i32) -> (i32, i32) {
    %c0_i32 = arith.constant 0 : i32
    %c0_i32_0 = arith.constant 0 : i32
    %c0_i32_1 = arith.constant 0 : i32
    return %c0_i32, %c0_i32_0 : i32, i32
  }
  func.func @transform_12(%arg0: i32) -> (i32, i32) {
    %c0_i32 = arith.constant 0 : i32
    %c0_i32_0 = arith.constant 0 : i32
    %c0_i32_1 = arith.constant 0 : i32
    return %c0_i32, %c0_i32_0 : i32, i32
  }
  func.func @transform_13(%arg0: i32) -> (i32, i32) {
    %c0_i32 = arith.constant 0 : i32
    %c0_i32_0 = arith.constant 0 : i32
    %c0_i32_1 = arith.constant 0 : i32
    return %c0_i32, %c0_i32_0 : i32, i32
  }
  func.func @transform_14(%arg0: i32) -> (i32, i32) {
    %c0_i32 = arith.constant 0 : i32
    %c0_i32_0 = arith.constant 0 : i32
    %c0_i32_1 = arith.constant 0 : i32
    return %c0_i32, %c0_i32_0 : i32, i32
  }
  func.func @transform_15(%arg0: i32) -> (i32, i32) {
    %c0_i32 = arith.constant 0 : i32
    %c0_i32_0 = arith.constant 0 : i32
    %c0_i32_1 = arith.constant 0 : i32
    return %c0_i32, %c0_i32_0 : i32, i32
  }
  func.func @transform_16(%arg0: i32) -> (i32, i32) {
    %c0_i32 = arith.constant 0 : i32
    %c0_i32_0 = arith.constant 0 : i32
    %c0_i32_1 = arith.constant 0 : i32
    return %c0_i32, %c0_i32_0 : i32, i32
  }
  func.func @transform_17(%arg0: i32) -> (i32, i32) {
    %c0_i32 = arith.constant 0 : i32
    %c0_i32_0 = arith.constant 0 : i32
    return %arg0, %c0_i32 : i32, i32
  }
}

</mosaic_0001>

<llo_original>
// kernel: qtran_qalt_forward.1
$region0: #{qtran_qalt_forward.1}
  #allocation0 [shape = 'u32[]', space=smem, size = 0x4, offset = 0x4, fixed_abs, tag = 'smem constant byte address 0x4 - core index']
  #allocation1 [shape = 'u32[144,128]{1,0:T(1,128)}', space=vmem, size = 0x12000, scoped, tag = 'internal scratch']
  %s0 = inlined_call_operand.vmem [shape: bf16[32,156], index: 0, kind: input, shape index: {}]
  %s1 = inlined_call_operand.vmem [shape: f32[96,96], index: 1, kind: input, shape index: {}]
  %s2 = inlined_call_operand.vmem [shape: f32[1,96], index: 2, kind: input, shape index: {}]
  %s3 = inlined_call_operand.vmem [shape: f32[96,96], index: 3, kind: input, shape index: {}]
  %s4 = inlined_call_operand.vmem [shape: f32[1,96], index: 4, kind: input, shape index: {}]
  %s5 = inlined_call_operand.vmem [shape: f32[156,15], index: 5, kind: input, shape index: {}]
  %s6 = inlined_call_operand.vmem [shape: f32[1,15], index: 6, kind: input, shape index: {}]
  %s7 = inlined_call_operand.vmem [shape: f32[15,15], index: 7, kind: input, shape index: {}]
  %s8 = inlined_call_operand.vmem [shape: f32[1,15], index: 8, kind: input, shape index: {}]
  %s9 = inlined_call_operand.vmem [shape: f32[156,96], index: 9, kind: input, shape index: {}]
  %s10 = inlined_call_operand.vmem [shape: f32[96,96], index: 10, kind: input, shape index: {}]
  %s11 = inlined_call_operand.vmem [shape: f32[15,96], index: 11, kind: input, shape index: {}]
  %s12 = inlined_call_operand.vmem [shape: f32[1,96], index: 12, kind: input, shape index: {}]
  %s13 = inlined_call_operand.vmem [shape: f32[96,96], index: 13, kind: input, shape index: {}]
  %s14 = inlined_call_operand.vmem [shape: f32[1,96], index: 14, kind: input, shape index: {}]
  %s15 = inlined_call_operand.vmem [shape: f32[96,15], index: 15, kind: input, shape index: {}]
  %s16 = inlined_call_operand.vmem [shape: f32[1,15], index: 16, kind: input, shape index: {}]
  %s17 = inlined_call_operand.vmem [shape: f32[32,15], index: 17, kind: output, shape index: {}]
  %s18 = sld [smem:[#allocation0]]
  $region101: #{qtran_qalt_forward.1} parent=0
    _
  %s20 = ssub.s32 1, %s18
  %s21 = scalar_select 0, %s20, %s18
  loop: start=0, step=1, limit=4
  $region2: #{qtran_qalt_forward.1} parent=0 // loop_pre_header
    _
  $region3: #{qtran_qalt_forward.1} parent=0 // loop_header
    %s23 = sphi 0, %s27
    %p24 = scmp.ge.s32.totalorder %s23, 4
    %s33 = sphi 0, %s35
    %s36 = sphi 0, %s33
    %s37 = sphi 0, %s36
    %s53 = sphi 0, %s37
    %s57 = sphi 0, %s57
    %s59 = sphi 0, %s57
    %s60 = sphi 0, %s59
    %s74 = sphi 0, %s60
    %s78 = sphi 0, %s78
    %s80 = sphi 0, %s78
    %s81 = sphi 0, %s80
    %s95 = sphi 0, %s81
    %s99 = sphi 0, %s99
    %s101 = sphi 0, %s99
    %s102 = sphi 0, %s101
    %s116 = sphi 0, %s102
    %s120 = sphi 0, %s120
    %s122 = sphi 0, %s120
    %s123 = sphi 0, %s122
    %s137 = sphi 0, %s123
    %s141 = sphi 0, %s141
    %s143 = sphi 0, %s141
    %s144 = sphi 0, %s143
    %s158 = sphi 0, %s144
    %s162 = sphi 0, %s162
    %s164 = sphi 0, %s162
    %s165 = sphi 0, %s164
    %s179 = sphi 0, %s165
    %s183 = sphi 0, %s183
    %s185 = sphi 0, %s183
    %s186 = sphi 0, %s185
    %s200 = sphi 0, %s186
    %s204 = sphi 0, %s204
    %s206 = sphi 0, %s204
    %s207 = sphi 0, %s206
    %s221 = sphi 0, %s207
    %s225 = sphi 0, %s225
    %s227 = sphi 0, %s225
    %s228 = sphi 0, %s227
    %s242 = sphi 0, %s228
    %s246 = sphi 0, %s246
    %s248 = sphi 0, %s246
    %s249 = sphi 0, %s248
    %s263 = sphi 0, %s249
    %s267 = sphi 0, %s267
    %s269 = sphi 0, %s267
    %s270 = sphi 0, %s269
    %s284 = sphi 0, %s270
    %s288 = sphi 0, %s288
    %s290 = sphi 0, %s288
    %s291 = sphi 0, %s290
    %s305 = sphi 0, %s291
    %s309 = sphi 0, %s309
    %s311 = sphi 0, %s309
    %s312 = sphi 0, %s311
    %s326 = sphi 0, %s312
    %s330 = sphi 0, %s330
    %s332 = sphi 0, %s330
    %s333 = sphi 0, %s332
    %s347 = sphi 0, %s333
    %s351 = sphi 0, %s351
    %s353 = sphi 0, %s351
    %s354 = sphi 0, %s353
    %s368 = sphi 0, %s354
    %s372 = sphi 0, %s372
    %s374 = sphi 0, %s372
    %s375 = sphi 0, %s374
    %s389 = sphi 0, %s375
    %s395 = sphi 0, %s397
    %s398 = sphi 0, %s395
    %s399 = sphi 0, %s398
    %s415 = sphi 0, %s399
  $region4: #{qtran_qalt_forward.1} parent=0 // loop_header_branch
    %26 = sbr.rel (%p24) target = $region8
  $region5: #{qtran_qalt_forward.1} parent=0 // loop_body
    %s28 = ssub.s32 %s23, 1
    %s29 = ssub.s32 %s23, 2
    %s30 = sadd.s32 %s23, 1
    %s31 = ssub.s32 %s23, %s30
    %p32 = scmp.eq.s32.totalorder %s31, 0
    %s34 = sadd.s32 %s33, 1
    %s35 = scalar_select %p32, %s33, %s34
    %p38 = pneg %p32
    %p39 = scmp.eq.s32.totalorder %s23, 1
    %p40 = por %p38, %p39
    %p41 = scmp.ne.s32.totalorder %s33, %s36
    %p42 = scmp.eq.s32.totalorder %s23, 0
    %p43 = por %p41, %p42
    %p44 = scmp.ne.s32.totalorder %s33, %s36
    %p45 = scmp.eq.s32.totalorder %s28, 1
    %p46 = por %p44, %p45
    %p47 = scmp.ne.s32.totalorder %s36, %s37
    %p48 = scmp.eq.s32.totalorder %s28, 0
    %p49 = por %p47, %p48
    %p50 = scmp.ne.s32.totalorder %s36, %s37
    %p51 = scmp.eq.s32.totalorder %s29, 1
    %p52 = por %p50, %p51
    %p54 = scmp.ne.s32.totalorder %s37, %s53
    %p55 = scmp.eq.s32.totalorder %s29, 0
    %p56 = por %p54, %p55
    %s58 = sadd.s32 %s57, 1
    %p61 = scmp.eq.s32.totalorder %s23, 1
    %p62 = scmp.ne.s32.totalorder %s57, %s59
    %p63 = scmp.eq.s32.totalorder %s23, 0
    %p64 = por %p62, %p63
    %p65 = scmp.ne.s32.totalorder %s57, %s59
    %p66 = scmp.eq.s32.totalorder %s28, 1
    %p67 = por %p65, %p66
    %p68 = scmp.ne.s32.totalorder %s59, %s60
    %p69 = scmp.eq.s32.totalorder %s28, 0
    %p70 = por %p68, %p69
    %p71 = scmp.ne.s32.totalorder %s59, %s60
    %p72 = scmp.eq.s32.totalorder %s29, 1
    %p73 = por %p71, %p72
    %p75 = scmp.ne.s32.totalorder %s60, %s74
    %p76 = scmp.eq.s32.totalorder %s29, 0
    %p77 = por %p75, %p76
    %s79 = sadd.s32 %s78, 1
    %p82 = scmp.eq.s32.totalorder %s23, 1
    %p83 = scmp.ne.s32.totalorder %s78, %s80
    %p84 = scmp.eq.s32.totalorder %s23, 0
    %p85 = por %p83, %p84
    %p86 = scmp.ne.s32.totalorder %s78, %s80
    %p87 = scmp.eq.s32.totalorder %s28, 1
    %p88 = por %p86, %p87
    %p89 = scmp.ne.s32.totalorder %s80, %s81
    %p90 = scmp.eq.s32.totalorder %s28, 0
    %p91 = por %p89, %p90
    %p92 = scmp.ne.s32.totalorder %s80, %s81
    %p93 = scmp.eq.s32.totalorder %s29, 1
    %p94 = por %p92, %p93
    %p96 = scmp.ne.s32.totalorder %s81, %s95
    %p97 = scmp.eq.s32.totalorder %s29, 0
    %p98 = por %p96, %p97
    %s100 = sadd.s32 %s99, 1
    %p103 = scmp.eq.s32.totalorder %s23, 1
    %p104 = scmp.ne.s32.totalorder %s99, %s101
    %p105 = scmp.eq.s32.totalorder %s23, 0
    %p106 = por %p104, %p105
    %p107 = scmp.ne.s32.totalorder %s99, %s101
    %p108 = scmp.eq.s32.totalorder %s28, 1
    %p109 = por %p107, %p108
    %p110 = scmp.ne.s32.totalorder %s101, %s102
    %p111 = scmp.eq.s32.totalorder %s28, 0
    %p112 = por %p110, %p111
    %p113 = scmp.ne.s32.totalorder %s101, %s102
    %p114 = scmp.eq.s32.totalorder %s29, 1
    %p115 = por %p113, %p114
    %p117 = scmp.ne.s32.totalorder %s102, %s116
    %p118 = scmp.eq.s32.totalorder %s29, 0
    %p119 = por %p117, %p118
    %s121 = sadd.s32 %s120, 1
    %p124 = scmp.eq.s32.totalorder %s23, 1
    %p125 = scmp.ne.s32.totalorder %s120, %s122
    %p126 = scmp.eq.s32.totalorder %s23, 0
    %p127 = por %p125, %p126
    %p128 = scmp.ne.s32.totalorder %s120, %s122
    %p129 = scmp.eq.s32.totalorder %s28, 1
    %p130 = por %p128, %p129
    %p131 = scmp.ne.s32.totalorder %s122, %s123
    %p132 = scmp.eq.s32.totalorder %s28, 0
    %p133 = por %p131, %p132
    %p134 = scmp.ne.s32.totalorder %s122, %s123
    %p135 = scmp.eq.s32.totalorder %s29, 1
    %p136 = por %p134, %p135
    %p138 = scmp.ne.s32.totalorder %s123, %s137
    %p139 = scmp.eq.s32.totalorder %s29, 0
    %p140 = por %p138, %p139
    %s142 = sadd.s32 %s141, 1
    %p145 = scmp.eq.s32.totalorder %s23, 1
    %p146 = scmp.ne.s32.totalorder %s141, %s143
    %p147 = scmp.eq.s32.totalorder %s23, 0
    %p148 = por %p146, %p147
    %p149 = scmp.ne.s32.totalorder %s141, %s143
    %p150 = scmp.eq.s32.totalorder %s28, 1
    %p151 = por %p149, %p150
    %p152 = scmp.ne.s32.totalorder %s143, %s144
    %p153 = scmp.eq.s32.totalorder %s28, 0
    %p154 = por %p152, %p153
    %p155 = scmp.ne.s32.totalorder %s143, %s144
    %p156 = scmp.eq.s32.totalorder %s29, 1
    %p157 = por %p155, %p156
    %p159 = scmp.ne.s32.totalorder %s144, %s158
    %p160 = scmp.eq.s32.totalorder %s29, 0
    %p161 = por %p159, %p160
    %s163 = sadd.s32 %s162, 1
    %p166 = scmp.eq.s32.totalorder %s23, 1
    %p167 = scmp.ne.s32.totalorder %s162, %s164
    %p168 = scmp.eq.s32.totalorder %s23, 0
    %p169 = por %p167, %p168
    %p170 = scmp.ne.s32.totalorder %s162, %s164
    %p171 = scmp.eq.s32.totalorder %s28, 1
    %p172 = por %p170, %p171
    %p173 = scmp.ne.s32.totalorder %s164, %s165
    %p174 = scmp.eq.s32.totalorder %s28, 0
    %p175 = por %p173, %p174
    %p176 = scmp.ne.s32.totalorder %s164, %s165
    %p177 = scmp.eq.s32.totalorder %s29, 1
    %p178 = por %p176, %p177
    %p180 = scmp.ne.s32.totalorder %s165, %s179
    %p181 = scmp.eq.s32.totalorder %s29, 0
    %p182 = por %p180, %p181
    %s184 = sadd.s32 %s183, 1
    %p187 = scmp.eq.s32.totalorder %s23, 1
    %p188 = scmp.ne.s32.totalorder %s183, %s185
    %p189 = scmp.eq.s32.totalorder %s23, 0
    %p190 = por %p188, %p189
    %p191 = scmp.ne.s32.totalorder %s183, %s185
    %p192 = scmp.eq.s32.totalorder %s28, 1
    %p193 = por %p191, %p192
    %p194 = scmp.ne.s32.totalorder %s185, %s186
    %p195 = scmp.eq.s32.totalorder %s28, 0
    %p196 = por %p194, %p195
    %p197 = scmp.ne.s32.totalorder %s185, %s186
    %p198 = scmp.eq.s32.totalorder %s29, 1
    %p199 = por %p197, %p198
    %p201 = scmp.ne.s32.totalorder %s186, %s200
    %p202 = scmp.eq.s32.totalorder %s29, 0
    %p203 = por %p201, %p202
    %s205 = sadd.s32 %s204, 1
    %p208 = scmp.eq.s32.totalorder %s23, 1
    %p209 = scmp.ne.s32.totalorder %s204, %s206
    %p210 = scmp.eq.s32.totalorder %s23, 0
    %p211 = por %p209, %p210
    %p212 = scmp.ne.s32.totalorder %s204, %s206
    %p213 = scmp.eq.s32.totalorder %s28, 1
    %p214 = por %p212, %p213
    %p215 = scmp.ne.s32.totalorder %s206, %s207
    %p216 = scmp.eq.s32.totalorder %s28, 0
    %p217 = por %p215, %p216
    %p218 = scmp.ne.s32.totalorder %s206, %s207
    %p219 = scmp.eq.s32.totalorder %s29, 1
    %p220 = por %p218, %p219
    %p222 = scmp.ne.s32.totalorder %s207, %s221
    %p223 = scmp.eq.s32.totalorder %s29, 0
    %p224 = por %p222, %p223
    %s226 = sadd.s32 %s225, 1
    %p229 = scmp.eq.s32.totalorder %s23, 1
    %p230 = scmp.ne.s32.totalorder %s225, %s227
    %p231 = scmp.eq.s32.totalorder %s23, 0
    %p232 = por %p230, %p231
    %p233 = scmp.ne.s32.totalorder %s225, %s227
    %p234 = scmp.eq.s32.totalorder %s28, 1
    %p235 = por %p233, %p234
    %p236 = scmp.ne.s32.totalorder %s227, %s228
    %p237 = scmp.eq.s32.totalorder %s28, 0
    %p238 = por %p236, %p237
    %p239 = scmp.ne.s32.totalorder %s227, %s228
    %p240 = scmp.eq.s32.totalorder %s29, 1
    %p241 = por %p239, %p240
    %p243 = scmp.ne.s32.totalorder %s228, %s242
    %p244 = scmp.eq.s32.totalorder %s29, 0
    %p245 = por %p243, %p244
    %s247 = sadd.s32 %s246, 1
    %p250 = scmp.eq.s32.totalorder %s23, 1
    %p251 = scmp.ne.s32.totalorder %s246, %s248
    %p252 = scmp.eq.s32.totalorder %s23, 0
    %p253 = por %p251, %p252
    %p254 = scmp.ne.s32.totalorder %s246, %s248
    %p255 = scmp.eq.s32.totalorder %s28, 1
    %p256 = por %p254, %p255
    %p257 = scmp.ne.s32.totalorder %s248, %s249
    %p258 = scmp.eq.s32.totalorder %s28, 0
    %p259 = por %p257, %p258
    %p260 = scmp.ne.s32.totalorder %s248, %s249
    %p261 = scmp.eq.s32.totalorder %s29, 1
    %p262 = por %p260, %p261
    %p264 = scmp.ne.s32.totalorder %s249, %s263
    %p265 = scmp.eq.s32.totalorder %s29, 0
    %p266 = por %p264, %p265
    %s268 = sadd.s32 %s267, 1
    %p271 = scmp.eq.s32.totalorder %s23, 1
    %p272 = scmp.ne.s32.totalorder %s267, %s269
    %p273 = scmp.eq.s32.totalorder %s23, 0
    %p274 = por %p272, %p273
    %p275 = scmp.ne.s32.totalorder %s267, %s269
    %p276 = scmp.eq.s32.totalorder %s28, 1
    %p277 = por %p275, %p276
    %p278 = scmp.ne.s32.totalorder %s269, %s270
    %p279 = scmp.eq.s32.totalorder %s28, 0
    %p280 = por %p278, %p279
    %p281 = scmp.ne.s32.totalorder %s269, %s270
    %p282 = scmp.eq.s32.totalorder %s29, 1
    %p283 = por %p281, %p282
    %p285 = scmp.ne.s32.totalorder %s270, %s284
    %p286 = scmp.eq.s32.totalorder %s29, 0
    %p287 = por %p285, %p286
    %s289 = sadd.s32 %s288, 1
    %p292 = scmp.eq.s32.totalorder %s23, 1
    %p293 = scmp.ne.s32.totalorder %s288, %s290
    %p294 = scmp.eq.s32.totalorder %s23, 0
    %p295 = por %p293, %p294
    %p296 = scmp.ne.s32.totalorder %s288, %s290
    %p297 = scmp.eq.s32.totalorder %s28, 1
    %p298 = por %p296, %p297
    %p299 = scmp.ne.s32.totalorder %s290, %s291
    %p300 = scmp.eq.s32.totalorder %s28, 0
    %p301 = por %p299, %p300
    %p302 = scmp.ne.s32.totalorder %s290, %s291
    %p303 = scmp.eq.s32.totalorder %s29, 1
    %p304 = por %p302, %p303
    %p306 = scmp.ne.s32.totalorder %s291, %s305
    %p307 = scmp.eq.s32.totalorder %s29, 0
    %p308 = por %p306, %p307
    %s310 = sadd.s32 %s309, 1
    %p313 = scmp.eq.s32.totalorder %s23, 1
    %p314 = scmp.ne.s32.totalorder %s309, %s311
    %p315 = scmp.eq.s32.totalorder %s23, 0
    %p316 = por %p314, %p315
    %p317 = scmp.ne.s32.totalorder %s309, %s311
    %p318 = scmp.eq.s32.totalorder %s28, 1
    %p319 = por %p317, %p318
    %p320 = scmp.ne.s32.totalorder %s311, %s312
    %p321 = scmp.eq.s32.totalorder %s28, 0
    %p322 = por %p320, %p321
    %p323 = scmp.ne.s32.totalorder %s311, %s312
    %p324 = scmp.eq.s32.totalorder %s29, 1
    %p325 = por %p323, %p324
    %p327 = scmp.ne.s32.totalorder %s312, %s326
    %p328 = scmp.eq.s32.totalorder %s29, 0
    %p329 = por %p327, %p328
    %s331 = sadd.s32 %s330, 1
    %p334 = scmp.eq.s32.totalorder %s23, 1
    %p335 = scmp.ne.s32.totalorder %s330, %s332
    %p336 = scmp.eq.s32.totalorder %s23, 0
    %p337 = por %p335, %p336
    %p338 = scmp.ne.s32.totalorder %s330, %s332
    %p339 = scmp.eq.s32.totalorder %s28, 1
    %p340 = por %p338, %p339
    %p341 = scmp.ne.s32.totalorder %s332, %s333
    %p342 = scmp.eq.s32.totalorder %s28, 0
    %p343 = por %p341, %p342
    %p344 = scmp.ne.s32.totalorder %s332, %s333
    %p345 = scmp.eq.s32.totalorder %s29, 1
    %p346 = por %p344, %p345
    %p348 = scmp.ne.s32.totalorder %s333, %s347
    %p349 = scmp.eq.s32.totalorder %s29, 0
    %p350 = por %p348, %p349
    %s352 = sadd.s32 %s351, 1
    %p355 = scmp.eq.s32.totalorder %s23, 1
    %p356 = scmp.ne.s32.totalorder %s351, %s353
    %p357 = scmp.eq.s32.totalorder %s23, 0
    %p358 = por %p356, %p357
    %p359 = scmp.ne.s32.totalorder %s351, %s353
    %p360 = scmp.eq.s32.totalorder %s28, 1
    %p361 = por %p359, %p360
    %p362 = scmp.ne.s32.totalorder %s353, %s354
    %p363 = scmp.eq.s32.totalorder %s28, 0
    %p364 = por %p362, %p363
    %p365 = scmp.ne.s32.totalorder %s353, %s354
    %p366 = scmp.eq.s32.totalorder %s29, 1
    %p367 = por %p365, %p366
    %p369 = scmp.ne.s32.totalorder %s354, %s368
    %p370 = scmp.eq.s32.totalorder %s29, 0
    %p371 = por %p369, %p370
    %s373 = sadd.s32 %s372, 1
    %p376 = scmp.eq.s32.totalorder %s23, 1
    %p377 = scmp.ne.s32.totalorder %s372, %s374
    %p378 = scmp.eq.s32.totalorder %s23, 0
    %p379 = por %p377, %p378
    %p380 = scmp.ne.s32.totalorder %s372, %s374
    %p381 = scmp.eq.s32.totalorder %s28, 1
    %p382 = por %p380, %p381
    %p383 = scmp.ne.s32.totalorder %s374, %s375
    %p384 = scmp.eq.s32.totalorder %s28, 0
    %p385 = por %p383, %p384
    %p386 = scmp.ne.s32.totalorder %s374, %s375
    %p387 = scmp.eq.s32.totalorder %s29, 1
    %p388 = por %p386, %p387
    %p390 = scmp.ne.s32.totalorder %s375, %s389
    %p391 = scmp.eq.s32.totalorder %s29, 0
    %p392 = por %p390, %p391
    %s393 = ssub.s32 %s23, %s30
    %p394 = scmp.eq.s32.totalorder %s393, 0
    %s396 = sadd.s32 %s395, 1
    %s397 = scalar_select %p394, %s395, %s396
    %p400 = pneg %p394
    %p401 = scmp.eq.s32.totalorder %s23, 1
    %p402 = por %p400, %p401
    %p403 = scmp.ne.s32.totalorder %s395, %s398
    %p404 = scmp.eq.s32.totalorder %s23, 0
    %p405 = por %p403, %p404
    %p406 = scmp.ne.s32.totalorder %s395, %s398
    %p407 = scmp.eq.s32.totalorder %s28, 1
    %p408 = por %p406, %p407
    %p409 = scmp.ne.s32.totalorder %s398, %s399
    %p410 = scmp.eq.s32.totalorder %s28, 0
    %p411 = por %p409, %p410
    %p412 = scmp.ne.s32.totalorder %s398, %s399
    %p413 = scmp.eq.s32.totalorder %s29, 1
    %p414 = por %p412, %p413
    %p416 = scmp.ne.s32.totalorder %s399, %s415
    %p417 = scmp.eq.s32.totalorder %s29, 0
    %p418 = por %p416, %p417
    %p419 = scmp.le.s32.totalorder 1, %s23
    %p420 = scmp.lt.s32.totalorder %s23, 3
    %p421 = pnand %p419, %p420
    %p422 = pneg %p421
    // Predicated region
    $region9: #{qtran_qalt_forward.1} parent=5 // pred_check
      _
    $region10: #{qtran_qalt_forward.1} parent=5 // pred_check_branch
      %424 = sbr.rel (%p421) target = $region12
    $region11: #{qtran_qalt_forward.1} parent=5 // pred_region
      %s425 = ssub.s32 %s23, 1
      // Predicated region
      $region13: #{qtran_qalt_forward.1} parent=11 // pred_check
        %p426 = pneg %p70
      $region14: #{qtran_qalt_forward.1} parent=11 // pred_check_branch
        %428 = sbr.rel (%p426) target = $region16
      $region15: #{qtran_qalt_forward.1} parent=11 // pred_region
        _
      $region16: #{qtran_qalt_forward.1} parent=11 // pred_fallthru
        _
      // Predicated region
      $region17: #{qtran_qalt_forward.1} parent=11 // pred_check
        %p429 = pneg %p91
      $region18: #{qtran_qalt_forward.1} parent=11 // pred_check_branch
        %431 = sbr.rel (%p429) target = $region20
      $region19: #{qtran_qalt_forward.1} parent=11 // pred_region
        _
      $region20: #{qtran_qalt_forward.1} parent=11 // pred_fallthru
        _
      // Predicated region
      $region21: #{qtran_qalt_forward.1} parent=11 // pred_check
        %p432 = pneg %p112
      $region22: #{qtran_qalt_forward.1} parent=11 // pred_check_branch
        %434 = sbr.rel (%p432) target = $region24
      $region23: #{qtran_qalt_forward.1} parent=11 // pred_region
        _
      $region24: #{qtran_qalt_forward.1} parent=11 // pred_fallthru
        _
      // Predicated region
      $region25: #{qtran_qalt_forward.1} parent=11 // pred_check
        %p435 = pneg %p133
      $region26: #{qtran_qalt_forward.1} parent=11 // pred_check_branch
        %437 = sbr.rel (%p435) target = $region28
      $region27: #{qtran_qalt_forward.1} parent=11 // pred_region
        _
      $region28: #{qtran_qalt_forward.1} parent=11 // pred_fallthru
        _
      // Predicated region
      $region29: #{qtran_qalt_forward.1} parent=11 // pred_check
        %p438 = pneg %p154
      $region30: #{qtran_qalt_forward.1} parent=11 // pred_check_branch
        %440 = sbr.rel (%p438) target = $region32
      $region31: #{qtran_qalt_forward.1} parent=11 // pred_region
        _
      $region32: #{qtran_qalt_forward.1} parent=11 // pred_fallthru
        _
      // Predicated region
      $region33: #{qtran_qalt_forward.1} parent=11 // pred_check
        %p441 = pneg %p175
      $region34: #{qtran_qalt_forward.1} parent=11 // pred_check_branch
        %443 = sbr.rel (%p441) target = $region36
      $region35: #{qtran_qalt_forward.1} parent=11 // pred_region
        _
      $region36: #{qtran_qalt_forward.1} parent=11 // pred_fallthru
        _
      // Predicated region
      $region37: #{qtran_qalt_forward.1} parent=11 // pred_check
        %p444 = pneg %p196
      $region38: #{qtran_qalt_forward.1} parent=11 // pred_check_branch
        %446 = sbr.rel (%p444) target = $region40
      $region39: #{qtran_qalt_forward.1} parent=11 // pred_region
        _
      $region40: #{qtran_qalt_forward.1} parent=11 // pred_fallthru
        _
      // Predicated region
      $region41: #{qtran_qalt_forward.1} parent=11 // pred_check
        %p447 = pneg %p217
      $region42: #{qtran_qalt_forward.1} parent=11 // pred_check_branch
        %449 = sbr.rel (%p447) target = $region44
      $region43: #{qtran_qalt_forward.1} parent=11 // pred_region
        _
      $region44: #{qtran_qalt_forward.1} parent=11 // pred_fallthru
        _
      // Predicated region
      $region45: #{qtran_qalt_forward.1} parent=11 // pred_check
        %p450 = pneg %p238
      $region46: #{qtran_qalt_forward.1} parent=11 // pred_check_branch
        %452 = sbr.rel (%p450) target = $region48
      $region47: #{qtran_qalt_forward.1} parent=11 // pred_region
        _
      $region48: #{qtran_qalt_forward.1} parent=11 // pred_fallthru
        _
      // Predicated region
      $region49: #{qtran_qalt_forward.1} parent=11 // pred_check
        %p453 = pneg %p259
      $region50: #{qtran_qalt_forward.1} parent=11 // pred_check_branch
        %455 = sbr.rel (%p453) target = $region52
      $region51: #{qtran_qalt_forward.1} parent=11 // pred_region
        _
      $region52: #{qtran_qalt_forward.1} parent=11 // pred_fallthru
        _
      // Predicated region
      $region53: #{qtran_qalt_forward.1} parent=11 // pred_check
        %p456 = pneg %p280
      $region54: #{qtran_qalt_forward.1} parent=11 // pred_check_branch
        %458 = sbr.rel (%p456) target = $region56
      $region55: #{qtran_qalt_forward.1} parent=11 // pred_region
        _
      $region56: #{qtran_qalt_forward.1} parent=11 // pred_fallthru
        _
      // Predicated region
      $region57: #{qtran_qalt_forward.1} parent=11 // pred_check
        %p459 = pneg %p301
      $region58: #{qtran_qalt_forward.1} parent=11 // pred_check_branch
        %461 = sbr.rel (%p459) target = $region60
      $region59: #{qtran_qalt_forward.1} parent=11 // pred_region
        _
      $region60: #{qtran_qalt_forward.1} parent=11 // pred_fallthru
        _
      // Predicated region
      $region61: #{qtran_qalt_forward.1} parent=11 // pred_check
        %p462 = pneg %p322
      $region62: #{qtran_qalt_forward.1} parent=11 // pred_check_branch
        %464 = sbr.rel (%p462) target = $region64
      $region63: #{qtran_qalt_forward.1} parent=11 // pred_region
        _
      $region64: #{qtran_qalt_forward.1} parent=11 // pred_fallthru
        _
      // Predicated region
      $region65: #{qtran_qalt_forward.1} parent=11 // pred_check
        %p465 = pneg %p343
      $region66: #{qtran_qalt_forward.1} parent=11 // pred_check_branch
        %467 = sbr.rel (%p465) target = $region68
      $region67: #{qtran_qalt_forward.1} parent=11 // pred_region
        _
      $region68: #{qtran_qalt_forward.1} parent=11 // pred_fallthru
        _
      // Predicated region
      $region69: #{qtran_qalt_forward.1} parent=11 // pred_check
        %p468 = pneg %p364
      $region70: #{qtran_qalt_forward.1} parent=11 // pred_check_branch
        %470 = sbr.rel (%p468) target = $region72
      $region71: #{qtran_qalt_forward.1} parent=11 // pred_region
        _
      $region72: #{qtran_qalt_forward.1} parent=11 // pred_fallthru
        _
      // Predicated region
      $region73: #{qtran_qalt_forward.1} parent=11 // pred_check
        %p471 = pneg %p385
      $region74: #{qtran_qalt_forward.1} parent=11 // pred_check_branch
        %473 = sbr.rel (%p471) target = $region76
      $region75: #{qtran_qalt_forward.1} parent=11 // pred_region
        _
      $region76: #{qtran_qalt_forward.1} parent=11 // pred_fallthru
        _
    $region12: #{qtran_qalt_forward.1} parent=5 // pred_fallthru
      _
    %p474 = scmp.lt.s32.totalorder %s23, 2
    // Predicated region
    $region77: #{qtran_qalt_forward.1} parent=5 // pred_check
      %p475 = pneg %p474
    $region78: #{qtran_qalt_forward.1} parent=5 // pred_check_branch
      %477 = sbr.rel (%p475) target = $region80
    $region79: #{qtran_qalt_forward.1} parent=5 // pred_region
      // Predicated region
      $region81: #{qtran_qalt_forward.1} parent=79 // pred_check
        %p478 = pneg %p43
      $region82: #{qtran_qalt_forward.1} parent=79 // pred_check_branch
        %480 = sbr.rel (%p478) target = $region84
      $region83: #{qtran_qalt_forward.1} parent=79 // pred_region
        %s481 = smul.u32 2, %s23
        %p482 = scmp.lt.s32.totalorder %s481, 3
        %s483 = scalar_select %p482, %s481, 3
        %s484 = smul.addr %s483, 2
        %s485 = smul.addr %s484, 4
        %s486 = scalar_lea.vmem %s0, %s485
        %s487 = smul.u32 2, %s23
      $region84: #{qtran_qalt_forward.1} parent=79 // pred_fallthru
        _
    $region80: #{qtran_qalt_forward.1} parent=5 // pred_fallthru
      _
    %p488 = scmp.le.s32.totalorder 1, %s23
    %p489 = scmp.lt.s32.totalorder %s23, 3
    %p490 = pnand %p488, %p489
    %p491 = pneg %p490
    // Predicated region
    $region85: #{qtran_qalt_forward.1} parent=5 // pred_check
      _
    $region86: #{qtran_qalt_forward.1} parent=5 // pred_check_branch
      %493 = sbr.rel (%p490) target = $region88
    $region87: #{qtran_qalt_forward.1} parent=5 // pred_region
      %s494 = ssub.s32 %s23, 1
      %s495 = smul.u32 2, %s28
      %p496 = scmp.lt.s32.totalorder %s495, 3
      %s497 = scalar_select %p496, %s495, 3
      %s498 = smul.addr %s497, 2
      %s499 = smul.addr %s498, 4
      %s500 = scalar_lea.vmem %s0, %s499
      %p501 = pneg %p49
      %p502 = pneg %p46
      %p503 = pneg %p70
      %p504 = pneg %p67
      %p505 = pneg %p91
      %p506 = pneg %p88
      %p507 = pneg %p112
      %p508 = pneg %p109
      %p509 = pneg %p133
      %p510 = pneg %p130
      %p511 = pneg %p154
      %p512 = pneg %p151
      %p513 = pneg %p175
      %p514 = pneg %p172
      %p515 = pneg %p196
      %p516 = pneg %p193
      %p517 = pneg %p217
      %p518 = pneg %p214
      %p519 = pneg %p238
      %p520 = pneg %p235
      %p521 = pneg %p259
      %p522 = pneg %p256
      %p523 = pneg %p280
      %p524 = pneg %p277
      %p525 = pneg %p301
      %p526 = pneg %p298
      %p527 = pneg %p322
      %p528 = pneg %p319
      %p529 = pneg %p343
      %p530 = pneg %p340
      %p531 = pneg %p364
      %p532 = pneg %p361
      %p533 = pneg %p385
      %p534 = pneg %p382
      %p535 = pneg %p411
      %p536 = pneg %p408
      %s537 = smul.u32 2, %s28
      %p538 = scmp.lt.s32.totalorder %s537, 3
      %s539 = scalar_select %p538, %s537, 3
      %s540 = smul.addr %s539, 8
      %s541 = scalar_lea.vmem %s17, %s540
      %s542 = smul.u32 2, %s28
      %p543 = scmp.lt.s32.totalorder %s542, 3
      %s544 = scalar_select %p543, %s542, 3
      %s545 = smul.addr %s544, 2
      %s546 = smul.addr %s545, 4
      %s547 = scalar_lea.vmem %s0, %s546
      %s548 = smul.u32 2, %s28
      %s549 = smul.u32 2, %s28
      %p550 = scmp.lt.s32.totalorder %s549, 3
      %s551 = scalar_select %p550, %s549, 3
      %s552 = smul.addr %s551, 8
      %s553 = scalar_lea.vmem %s17, %s552
      %s554 = smul.u32 2, %s28
      %v555 = vld [vmem:[%s547] sm:$0xff]
      %v556 = vld [vmem:[%s547 + $0x8] sm:$0xff]
      %v557 = vunpack.c.l.bf16 %v555
      %v558 = vunpack.c.h.bf16 %v555
      %v559 = vunpack.c.l.bf16 %v556
      %v560 = vunpack.c.h.bf16 %v556
      %v561 = vld [vmem:[%s1] sm:$0xff]
      %v562 = vld [vmem:[%s1 + $0x8] sm:$0xff]
      %v563 = vld [vmem:[%s1 + $0x10] sm:$0xff]
      %v564 = vld [vmem:[%s1 + $0x18] sm:$0xff]
      %v565 = vld [vmem:[%s1 + $0x20] sm:$0xff]
      %v566 = vld [vmem:[%s1 + $0x28] sm:$0xff]
      %v567 = vld [vmem:[%s1 + $0x30] sm:$0xff]
      %v568 = vld [vmem:[%s1 + $0x38] sm:$0xff]
      %v569 = vld [vmem:[%s1 + $0x40] sm:$0xff]
      %v570 = vld [vmem:[%s1 + $0x48] sm:$0xff]
      %v571 = vld [vmem:[%s1 + $0x50] sm:$0xff]
      %v572 = vld [vmem:[%s1 + $0x58] sm:$0xff]
      %v573 = vld [vmem:[%s2] sm:$0x1]
      %v575 = vlaneseq
      %v576 = vshrl.u32 %v575, 7
      %v577 = vsub.s32 0, %v576
      %v578 = vrot.slane %v573, %v577
      %vm580 = vcmask 785408
      %v582 = vsel %vm580, %v557, 0
      %v585 = vsel %vm580, %v559, 0
      %587 = vmatprep.subr.mxu0 0.0
      %588 = vmatpush1.msra.mxu0 %v561
      %589 = vmatprep.subr.mxu0 0.0
      %590 = vmatpush1.msra.mxu0 %v562
      %591 = vmatprep.subr.mxu0 0.0
      %592 = vmatpush1.msra.mxu0 %v563
      %593 = vmatprep.subr.mxu0 0.0
      %594 = vmatpush1.msra.mxu0 %v564
      %595 = vmatprep.subr.mxu0 0.0
      %596 = vmatpush1.msra.mxu0 %v565
      %597 = vmatprep.subr.mxu0 0.0
      %598 = vmatpush1.msra.mxu0 %v566
      %599 = vmatprep.subr.mxu0 0.0
      %600 = vmatpush1.msra.mxu0 %v567
      %601 = vmatprep.subr.mxu0 0.0
      %602 = vmatpush1.msra.mxu0 %v568
      %603 = vmatprep.subr.mxu0 0.0
      %604 = vmatpush1.msra.mxu0 %v569
      %605 = vmatprep.subr.mxu0 0.0
      %606 = vmatpush1.msra.mxu0 %v570
      %607 = vmatprep.subr.mxu0 0.0
      %608 = vmatpush1.msra.mxu0 %v571
      %609 = vmatprep.subr.mxu0 0.0
      %610 = vmatpush1.msra.mxu0 %v572
      %611 = vmatprep.subr.mxu0 0.0
      %612 = vmatpush1.msra.mxu0 0.0
      %613 = vmatprep.subr.mxu0 0.0
      %614 = vmatpush1.msra.mxu0 0.0
      %615 = vmatprep.subr.mxu0 0.0
      %616 = vmatpush1.msra.mxu0 0.0
      %617 = vmatprep.subr.mxu0 0.0
      %618 = vmatpush1.msra.mxu0 0.0
      %619 = vmatprep.subr.mxu0 0.0
      %620 = vmatpush1.msra.mxu0 0.0
      %621 = vmatprep.subr.mxu0 0.0
      %622 = vmatpush1.msra.mxu0 0.0
      %623 = vmatprep.subr.mxu0 0.0
      %624 = vmatpush1.msra.mxu0 0.0
      %625 = vmatprep.subr.mxu0 0.0
      %626 = vmatpush1.msra.mxu0 0.0
      %627 = vmatprep.subr.mxu0 0.0
      %628 = vmatpush1.msra.mxu0 0.0
      %629 = vmatprep.subr.mxu0 0.0
      %630 = vmatpush1.msra.mxu0 0.0
      %631 = vmatprep.subr.mxu0 0.0
      %632 = vmatpush1.msra.mxu0 0.0
      %633 = vmatprep.subr.mxu0 0.0
      %634 = vmatpush1.msra.mxu0 0.0
      %635 = vmatprep.subr.mxu0 0.0
      %636 = vmatpush1.msra.mxu0 0.0
      %637 = vmatprep.subr.mxu0 0.0
      %638 = vmatpush1.msra.mxu0 0.0
      %639 = vmatprep.subr.mxu0 0.0
      %640 = vmatpush1.msra.mxu0 0.0
      %641 = vmatprep.subr.mxu0 0.0
      %642 = vmatpush1.msra.mxu0 0.0
      %643 = vmatprep.subr.mxu0 0.0
      %644 = vmatpush1.msra.mxu0 0.0
      %645 = vmatprep.subr.mxu0 0.0
      %646 = vmatpush1.msra.mxu0 0.0
      %647 = vmatprep.subr.mxu0 0.0
      %648 = vmatpush1.msra.mxu0 0.0
      %649 = vmatprep.subr.mxu0 0.0
      %650 = vmatpush1.msra.mxu0 0.0
      %651 = vmatprep.mubr.f32.mxu0 0.0
      %652 = vmatmul.mubr.f32.gmra.mrb[0].mxu0 %v582
      %v653 = vpop.f32.mrb[0].mxu0
      %v654 = vadd.f32 %v578, %v653
      %v655 = vpop.f32.mrb[0].mxu0
      %656 = vmatprep.mubr.f32.mxu0 0.0
      %657 = vmatmul.mubr.f32.gmra.mrb[0].mxu0 %v585
      %v658 = vpop.f32.mrb[0].mxu0
      %v659 = vadd.f32 %v578, %v658
      %v660 = vpop.f32.mrb[0].mxu0
      %661 = vdwg.mxu0
      %v662 = vmax.f32 %v654, 0.0
      %v663 = vmax.f32 %v659, 0.0
      %v664 = vld [vmem:[%s3] sm:$0xff]
      %v665 = vld [vmem:[%s3 + $0x8] sm:$0xff]
      %v666 = vld [vmem:[%s3 + $0x10] sm:$0xff]
      %v667 = vld [vmem:[%s3 + $0x18] sm:$0xff]
      %v668 = vld [vmem:[%s3 + $0x20] sm:$0xff]
      %v669 = vld [vmem:[%s3 + $0x28] sm:$0xff]
      %v670 = vld [vmem:[%s3 + $0x30] sm:$0xff]
      %v671 = vld [vmem:[%s3 + $0x38] sm:$0xff]
      %v672 = vld [vmem:[%s3 + $0x40] sm:$0xff]
      %v673 = vld [vmem:[%s3 + $0x48] sm:$0xff]
      %v674 = vld [vmem:[%s3 + $0x50] sm:$0xff]
      %v675 = vld [vmem:[%s3 + $0x58] sm:$0xff]
      %v676 = vld [vmem:[%s4] sm:$0x1]
      %v678 = vlaneseq
      %v679 = vshrl.u32 %v678, 7
      %v680 = vsub.s32 0, %v679
      %v681 = vrot.slane %v676, %v680
      %v684 = vsel %vm580, %v662, 0
      %v687 = vsel %vm580, %v663, 0
      %689 = vmatprep.subr.mxu0 0.0
      %690 = vmatpush1.msra.mxu0 %v664
      %691 = vmatprep.subr.mxu0 0.0
      %692 = vmatpush1.msra.mxu0 %v665
      %693 = vmatprep.subr.mxu0 0.0
      %694 = vmatpush1.msra.mxu0 %v666
      %695 = vmatprep.subr.mxu0 0.0
      %696 = vmatpush1.msra.mxu0 %v667
      %697 = vmatprep.subr.mxu0 0.0
      %698 = vmatpush1.msra.mxu0 %v668
      %699 = vmatprep.subr.mxu0 0.0
      %700 = vmatpush1.msra.mxu0 %v669
      %701 = vmatprep.subr.mxu0 0.0
      %702 = vmatpush1.msra.mxu0 %v670
      %703 = vmatprep.subr.mxu0 0.0
      %704 = vmatpush1.msra.mxu0 %v671
      %705 = vmatprep.subr.mxu0 0.0
      %706 = vmatpush1.msra.mxu0 %v672
      %707 = vmatprep.subr.mxu0 0.0
      %708 = vmatpush1.msra.mxu0 %v673
      %709 = vmatprep.subr.mxu0 0.0
      %710 = vmatpush1.msra.mxu0 %v674
      %711 = vmatprep.subr.mxu0 0.0
      %712 = vmatpush1.msra.mxu0 %v675
      %713 = vmatprep.subr.mxu0 0.0
      %714 = vmatpush1.msra.mxu0 0.0
      %715 = vmatprep.subr.mxu0 0.0
      %716 = vmatpush1.msra.mxu0 0.0
      %717 = vmatprep.subr.mxu0 0.0
      %718 = vmatpush1.msra.mxu0 0.0
      %719 = vmatprep.subr.mxu0 0.0
      %720 = vmatpush1.msra.mxu0 0.0
      %721 = vmatprep.subr.mxu0 0.0
      %722 = vmatpush1.msra.mxu0 0.0
      %723 = vmatprep.subr.mxu0 0.0
      %724 = vmatpush1.msra.mxu0 0.0
      %725 = vmatprep.subr.mxu0 0.0
      %726 = vmatpush1.msra.mxu0 0.0
      %727 = vmatprep.subr.mxu0 0.0
      %728 = vmatpush1.msra.mxu0 0.0
      %729 = vmatprep.subr.mxu0 0.0
      %730 = vmatpush1.msra.mxu0 0.0
      %731 = vmatprep.subr.mxu0 0.0
      %732 = vmatpush1.msra.mxu0 0.0
      %733 = vmatprep.subr.mxu0 0.0
      %734 = vmatpush1.msra.mxu0 0.0
      %735 = vmatprep.subr.mxu0 0.0
      %736 = vmatpush1.msra.mxu0 0.0
      %737 = vmatprep.subr.mxu0 0.0
      %738 = vmatpush1.msra.mxu0 0.0
      %739 = vmatprep.subr.mxu0 0.0
      %740 = vmatpush1.msra.mxu0 0.0
      %741 = vmatprep.subr.mxu0 0.0
      %742 = vmatpush1.msra.mxu0 0.0
      %743 = vmatprep.subr.mxu0 0.0
      %744 = vmatpush1.msra.mxu0 0.0
      %745 = vmatprep.subr.mxu0 0.0
      %746 = vmatpush1.msra.mxu0 0.0
      %747 = vmatprep.subr.mxu0 0.0
      %748 = vmatpush1.msra.mxu0 0.0
      %749 = vmatprep.subr.mxu0 0.0
      %750 = vmatpush1.msra.mxu0 0.0
      %751 = vmatprep.subr.mxu0 0.0
      %752 = vmatpush1.msra.mxu0 0.0
      %753 = vmatprep.mubr.f32.mxu0 0.0
      %754 = vmatmul.mubr.f32.gmra.mrb[0].mxu0 %v684
      %v755 = vpop.f32.mrb[0].mxu0
      %v756 = vadd.f32 %v681, %v755
      %v757 = vpop.f32.mrb[0].mxu0
      %758 = vmatprep.mubr.f32.mxu0 0.0
      %759 = vmatmul.mubr.f32.gmra.mrb[0].mxu0 %v687
      %v760 = vpop.f32.mrb[0].mxu0
      %v761 = vadd.f32 %v681, %v760
      %v762 = vpop.f32.mrb[0].mxu0
      %763 = vdwg.mxu0
      %v764 = vld [vmem:[%s5] sm:$0xff]
      %v765 = vld [vmem:[%s5 + $0x8] sm:$0xff]
      %v766 = vld [vmem:[%s5 + $0x10] sm:$0xff]
      %v767 = vld [vmem:[%s5 + $0x18] sm:$0xff]
      %v768 = vld [vmem:[%s5 + $0x20] sm:$0xff]
      %v769 = vld [vmem:[%s5 + $0x28] sm:$0xff]
      %v770 = vld [vmem:[%s5 + $0x30] sm:$0xff]
      %v771 = vld [vmem:[%s5 + $0x38] sm:$0xff]
      %v772 = vld [vmem:[%s5 + $0x40] sm:$0xff]
      %v773 = vld [vmem:[%s5 + $0x48] sm:$0xff]
      %v774 = vld [vmem:[%s5 + $0x50] sm:$0xff]
      %v775 = vld [vmem:[%s5 + $0x58] sm:$0xff]
      %v776 = vld [vmem:[%s5 + $0x60] sm:$0xff]
      %v777 = vld [vmem:[%s5 + $0x68] sm:$0xff]
      %v778 = vld [vmem:[%s5 + $0x70] sm:$0xff]
      %v779 = vld [vmem:[%s5 + $0x78] sm:$0xff]
      %v780 = vld [vmem:[%s5 + $0x80] sm:$0xff]
      %v781 = vld [vmem:[%s5 + $0x88] sm:$0xff]
      %v782 = vld [vmem:[%s5 + $0x90] sm:$0xff]
      %v783 = vld [vmem:[%s5 + $0x98] sm:$0xf]
      %v784 = vld [vmem:[%s6] sm:$0x1]
      %v786 = vlaneseq
      %v787 = vshrl.u32 %v786, 7
      %v788 = vsub.s32 0, %v787
      %v789 = vrot.slane %v784, %v788
      %vm791 = vcmask 228352
      %v793 = vsel %vm791, %v558, 0
      %v796 = vsel %vm791, %v560, 0
      %vm798 = vcmask 1043456
      %v800 = vsel %vm798, %v783, 0
      %802 = vmatprep.subr.mxu0 0.0
      %803 = vmatpush1.msra.mxu0 %v764
      %804 = vmatprep.subr.mxu0 0.0
      %805 = vmatpush1.msra.mxu0 %v765
      %806 = vmatprep.subr.mxu0 0.0
      %807 = vmatpush1.msra.mxu0 %v766
      %808 = vmatprep.subr.mxu0 0.0
      %809 = vmatpush1.msra.mxu0 %v767
      %810 = vmatprep.subr.mxu0 0.0
      %811 = vmatpush1.msra.mxu0 %v768
      %812 = vmatprep.subr.mxu0 0.0
      %813 = vmatpush1.msra.mxu0 %v769
      %814 = vmatprep.subr.mxu0 0.0
      %815 = vmatpush1.msra.mxu0 %v770
      %816 = vmatprep.subr.mxu0 0.0
      %817 = vmatpush1.msra.mxu0 %v771
      %818 = vmatprep.subr.mxu0 0.0
      %819 = vmatpush1.msra.mxu0 %v772
      %820 = vmatprep.subr.mxu0 0.0
      %821 = vmatpush1.msra.mxu0 %v773
      %822 = vmatprep.subr.mxu0 0.0
      %823 = vmatpush1.msra.mxu0 %v774
      %824 = vmatprep.subr.mxu0 0.0
      %825 = vmatpush1.msra.mxu0 %v775
      %826 = vmatprep.subr.mxu0 0.0
      %827 = vmatpush1.msra.mxu0 %v776
      %828 = vmatprep.subr.mxu0 0.0
      %829 = vmatpush1.msra.mxu0 %v777
      %830 = vmatprep.subr.mxu0 0.0
      %831 = vmatpush1.msra.mxu0 %v778
      %832 = vmatprep.subr.mxu0 0.0
      %833 = vmatpush1.msra.mxu0 %v779
      %834 = vmatprep.subr.mxu0 0.0
      %835 = vmatpush1.msra.mxu0 %v780
      %836 = vmatprep.subr.mxu0 0.0
      %837 = vmatpush1.msra.mxu0 %v781
      %838 = vmatprep.subr.mxu0 0.0
      %839 = vmatpush1.msra.mxu0 %v782
      %840 = vmatprep.subr.mxu0 0.0
      %841 = vmatpush1.msra.mxu0 %v800
      %842 = vmatprep.subr.mxu0 0.0
      %843 = vmatpush1.msra.mxu0 0.0
      %844 = vmatprep.subr.mxu0 0.0
      %845 = vmatpush1.msra.mxu0 0.0
      %846 = vmatprep.subr.mxu0 0.0
      %847 = vmatpush1.msra.mxu0 0.0
      %848 = vmatprep.subr.mxu0 0.0
      %849 = vmatpush1.msra.mxu0 0.0
      %850 = vmatprep.subr.mxu0 0.0
      %851 = vmatpush1.msra.mxu0 0.0
      %852 = vmatprep.subr.mxu0 0.0
      %853 = vmatpush1.msra.mxu0 0.0
      %854 = vmatprep.subr.mxu0 0.0
      %855 = vmatpush1.msra.mxu0 0.0
      %856 = vmatprep.subr.mxu0 0.0
      %857 = vmatpush1.msra.mxu0 0.0
      %858 = vmatprep.subr.mxu0 0.0
      %859 = vmatpush1.msra.mxu0 0.0
      %860 = vmatprep.subr.mxu0 0.0
      %861 = vmatpush1.msra.mxu0 0.0
      %862 = vmatprep.subr.mxu0 0.0
      %863 = vmatpush1.msra.mxu0 0.0
      %864 = vmatprep.subr.mxu0 0.0
      %865 = vmatpush1.msra.mxu0 0.0
      %866 = vmatprep.mubr.f32.mxu0 %v793
      %867 = vmatmul.mubr.f32.gmra.mrb[0].mxu0 %v557
      %v868 = vpop.f32.mrb[0].mxu0
      %v869 = vadd.f32 %v789, %v868
      %v870 = vpop.f32.mrb[0].mxu0
      %871 = vmatprep.mubr.f32.mxu0 %v796
      %872 = vmatmul.mubr.f32.gmra.mrb[0].mxu0 %v559
      %v873 = vpop.f32.mrb[0].mxu0
      %v874 = vadd.f32 %v789, %v873
      %v875 = vpop.f32.mrb[0].mxu0
      %876 = vdwg.mxu0
      %v877 = vmax.f32 %v869, 0.0
      %v878 = vmax.f32 %v874, 0.0
      %v879 = vld [vmem:[%s7] sm:$0xff]
      %v880 = vld [vmem:[%s7 + $0x8] sm:$0x7f]
      %v881 = vld [vmem:[%s8] sm:$0x1]
      %v883 = vlaneseq
      %v884 = vshrl.u32 %v883, 7
      %v885 = vsub.s32 0, %v884
      %v886 = vrot.slane %v881, %v885
      %vm888 = vcmask 121856
      %v890 = vsel %vm888, %v877, 0
      %v893 = vsel %vm888, %v878, 0
      %vm895 = vcmask 1046528
      %v897 = vsel %vm895, %v880, 0
      %899 = vmatprep.subr.mxu0 0.0
      %900 = vmatpush1.msra.mxu0 %v879
      %901 = vmatprep.subr.mxu0 0.0
      %902 = vmatpush1.msra.mxu0 %v897
      %903 = vmatprep.subr.mxu0 0.0
      %904 = vmatpush1.msra.mxu0 0.0
      %905 = vmatprep.subr.mxu0 0.0
      %906 = vmatpush1.msra.mxu0 0.0
      %907 = vmatprep.subr.mxu0 0.0
      %908 = vmatpush1.msra.mxu0 0.0
      %909 = vmatprep.subr.mxu0 0.0
      %910 = vmatpush1.msra.mxu0 0.0
      %911 = vmatprep.subr.mxu0 0.0
      %912 = vmatpush1.msra.mxu0 0.0
      %913 = vmatprep.subr.mxu0 0.0
      %914 = vmatpush1.msra.mxu0 0.0
      %915 = vmatprep.subr.mxu0 0.0
      %916 = vmatpush1.msra.mxu0 0.0
      %917 = vmatprep.subr.mxu0 0.0
      %918 = vmatpush1.msra.mxu0 0.0
      %919 = vmatprep.subr.mxu0 0.0
      %920 = vmatpush1.msra.mxu0 0.0
      %921 = vmatprep.subr.mxu0 0.0
      %922 = vmatpush1.msra.mxu0 0.0
      %923 = vmatprep.subr.mxu0 0.0
      %924 = vmatpush1.msra.mxu0 0.0
      %925 = vmatprep.subr.mxu0 0.0
      %926 = vmatpush1.msra.mxu0 0.0
      %927 = vmatprep.subr.mxu0 0.0
      %928 = vmatpush1.msra.mxu0 0.0
      %929 = vmatprep.subr.mxu0 0.0
      %930 = vmatpush1.msra.mxu0 0.0
      %931 = vmatprep.subr.mxu0 0.0
      %932 = vmatpush1.msra.mxu0 0.0
      %933 = vmatprep.subr.mxu0 0.0
      %934 = vmatpush1.msra.mxu0 0.0
      %935 = vmatprep.subr.mxu0 0.0
      %936 = vmatpush1.msra.mxu0 0.0
      %937 = vmatprep.subr.mxu0 0.0
      %938 = vmatpush1.msra.mxu0 0.0
      %939 = vmatprep.subr.mxu0 0.0
      %940 = vmatpush1.msra.mxu0 0.0
      %941 = vmatprep.subr.mxu0 0.0
      %942 = vmatpush1.msra.mxu0 0.0
      %943 = vmatprep.subr.mxu0 0.0
      %944 = vmatpush1.msra.mxu0 0.0
      %945 = vmatprep.subr.mxu0 0.0
      %946 = vmatpush1.msra.mxu0 0.0
      %947 = vmatprep.subr.mxu0 0.0
      %948 = vmatpush1.msra.mxu0 0.0
      %949 = vmatprep.subr.mxu0 0.0
      %950 = vmatpush1.msra.mxu0 0.0
      %951 = vmatprep.subr.mxu0 0.0
      %952 = vmatpush1.msra.mxu0 0.0
      %953 = vmatprep.subr.mxu0 0.0
      %954 = vmatpush1.msra.mxu0 0.0
      %955 = vmatprep.subr.mxu0 0.0
      %956 = vmatpush1.msra.mxu0 0.0
      %957 = vmatprep.subr.mxu0 0.0
      %958 = vmatpush1.msra.mxu0 0.0
      %959 = vmatprep.subr.mxu0 0.0
      %960 = vmatpush1.msra.mxu0 0.0
      %961 = vmatprep.subr.mxu0 0.0
      %962 = vmatpush1.msra.mxu0 0.0
      %963 = vmatprep.mubr.f32.mxu0 0.0
      %964 = vmatmul.mubr.f32.gmra.mrb[0].mxu0 %v890
      %v965 = vpop.f32.mrb[0].mxu0
      %v966 = vadd.f32 %v886, %v965
      %v967 = vpop.f32.mrb[0].mxu0
      %968 = vmatprep.mubr.f32.mxu0 0.0
      %969 = vmatmul.mubr.f32.gmra.mrb[0].mxu0 %v893
      %v970 = vpop.f32.mrb[0].mxu0
      %v971 = vadd.f32 %v886, %v970
      %v972 = vpop.f32.mrb[0].mxu0
      %973 = vdwg.mxu0
      %v974 = vld [vmem:[%s9] sm:$0xff]
      %v975 = vld [vmem:[%s9 + $0x8] sm:$0xff]
      %v976 = vld [vmem:[%s9 + $0x10] sm:$0xff]
      %v977 = vld [vmem:[%s9 + $0x18] sm:$0xff]
      %v978 = vld [vmem:[%s9 + $0x20] sm:$0xff]
      %v979 = vld [vmem:[%s9 + $0x28] sm:$0xff]
      %v980 = vld [vmem:[%s9 + $0x30] sm:$0xff]
      %v981 = vld [vmem:[%s9 + $0x38] sm:$0xff]
      %v982 = vld [vmem:[%s9 + $0x40] sm:$0xff]
      %v983 = vld [vmem:[%s9 + $0x48] sm:$0xff]
      %v984 = vld [vmem:[%s9 + $0x50] sm:$0xff]
      %v985 = vld [vmem:[%s9 + $0x58] sm:$0xff]
      %v986 = vld [vmem:[%s9 + $0x60] sm:$0xff]
      %v987 = vld [vmem:[%s9 + $0x68] sm:$0xff]
      %v988 = vld [vmem:[%s9 + $0x70] sm:$0xff]
      %v989 = vld [vmem:[%s9 + $0x78] sm:$0xff]
      %v990 = vld [vmem:[%s9 + $0x80] sm:$0xff]
      %v991 = vld [vmem:[%s9 + $0x88] sm:$0xff]
      %v992 = vld [vmem:[%s9 + $0x90] sm:$0xff]
      %v993 = vld [vmem:[%s9 + $0x98] sm:$0xf]
      %v994 = vld [vmem:[%s10] sm:$0xff]
      %v995 = vld [vmem:[%s10 + $0x8] sm:$0xff]
      %v996 = vld [vmem:[%s10 + $0x10] sm:$0xff]
      %v997 = vld [vmem:[%s10 + $0x18] sm:$0xff]
      %v998 = vld [vmem:[%s10 + $0x20] sm:$0xff]
      %v999 = vld [vmem:[%s10 + $0x28] sm:$0xff]
      %v1000 = vld [vmem:[%s10 + $0x30] sm:$0xff]
      %v1001 = vld [vmem:[%s10 + $0x38] sm:$0xff]
      %v1002 = vld [vmem:[%s10 + $0x40] sm:$0xff]
      %v1003 = vld [vmem:[%s10 + $0x48] sm:$0xff]
      %v1004 = vld [vmem:[%s10 + $0x50] sm:$0xff]
      %v1005 = vld [vmem:[%s10 + $0x58] sm:$0xff]
      %v1007 = vsel %vm580, %v756, 0
      %v1010 = vsel %vm580, %v761, 0
      %1012 = vmatprep.subr.mxu0 0.0
      %1013 = vmatpush1.msra.mxu0 %v994
      %1014 = vmatprep.subr.mxu0 0.0
      %1015 = vmatpush1.msra.mxu0 %v995
      %1016 = vmatprep.subr.mxu0 0.0
      %1017 = vmatpush1.msra.mxu0 %v996
      %1018 = vmatprep.subr.mxu0 0.0
      %1019 = vmatpush1.msra.mxu0 %v997
      %1020 = vmatprep.subr.mxu0 0.0
      %1021 = vmatpush1.msra.mxu0 %v998
      %1022 = vmatprep.subr.mxu0 0.0
      %1023 = vmatpush1.msra.mxu0 %v999
      %1024 = vmatprep.subr.mxu0 0.0
      %1025 = vmatpush1.msra.mxu0 %v1000
      %1026 = vmatprep.subr.mxu0 0.0
      %1027 = vmatpush1.msra.mxu0 %v1001
      %1028 = vmatprep.subr.mxu0 0.0
      %1029 = vmatpush1.msra.mxu0 %v1002
      %1030 = vmatprep.subr.mxu0 0.0
      %1031 = vmatpush1.msra.mxu0 %v1003
      %1032 = vmatprep.subr.mxu0 0.0
      %1033 = vmatpush1.msra.mxu0 %v1004
      %1034 = vmatprep.subr.mxu0 0.0
      %1035 = vmatpush1.msra.mxu0 %v1005
      %1036 = vmatprep.subr.mxu0 0.0
      %1037 = vmatpush1.msra.mxu0 0.0
      %1038 = vmatprep.subr.mxu0 0.0
      %1039 = vmatpush1.msra.mxu0 0.0
      %1040 = vmatprep.subr.mxu0 0.0
      %1041 = vmatpush1.msra.mxu0 0.0
      %1042 = vmatprep.subr.mxu0 0.0
      %1043 = vmatpush1.msra.mxu0 0.0
      %1044 = vmatprep.subr.mxu0 0.0
      %1045 = vmatpush1.msra.mxu0 0.0
      %1046 = vmatprep.subr.mxu0 0.0
      %1047 = vmatpush1.msra.mxu0 0.0
      %1048 = vmatprep.subr.mxu0 0.0
      %1049 = vmatpush1.msra.mxu0 0.0
      %1050 = vmatprep.subr.mxu0 0.0
      %1051 = vmatpush1.msra.mxu0 0.0
      %1052 = vmatprep.subr.mxu0 0.0
      %1053 = vmatpush1.msra.mxu0 0.0
      %1054 = vmatprep.subr.mxu0 0.0
      %1055 = vmatpush1.msra.mxu0 0.0
      %1056 = vmatprep.subr.mxu0 0.0
      %1057 = vmatpush1.msra.mxu0 0.0
      %1058 = vmatprep.subr.mxu0 0.0
      %1059 = vmatpush1.msra.mxu0 0.0
      %1060 = vmatprep.subr.mxu0 0.0
      %1061 = vmatpush1.msra.mxu0 0.0
      %1062 = vmatprep.subr.mxu0 0.0
      %1063 = vmatpush1.msra.mxu0 0.0
      %1064 = vmatprep.subr.mxu0 0.0
      %1065 = vmatpush1.msra.mxu0 0.0
      %1066 = vmatprep.subr.mxu0 0.0
      %1067 = vmatpush1.msra.mxu0 0.0
      %1068 = vmatprep.subr.mxu0 0.0
      %1069 = vmatpush1.msra.mxu0 0.0
      %1070 = vmatprep.subr.mxu0 0.0
      %1071 = vmatpush1.msra.mxu0 0.0
      %1072 = vmatprep.subr.mxu0 0.0
      %1073 = vmatpush1.msra.mxu0 0.0
      %1074 = vmatprep.subr.mxu0 0.0
      %1075 = vmatpush1.msra.mxu0 0.0
      %1076 = vmatprep.mubr.f32.mxu0 0.0
      %1077 = vmatmul.mubr.f32.gmra.mrb[0].mxu0 %v1007
      %v1078 = vpop.f32.mrb[0].mxu0
      %v1079 = vadd.f32 0.0, %v1078
      %v1080 = vpop.f32.mrb[0].mxu0
      %1081 = vmatprep.mubr.f32.mxu0 0.0
      %1082 = vmatmul.mubr.f32.gmra.mrb[0].mxu0 %v1010
      %v1083 = vpop.f32.mrb[0].mxu0
      %v1084 = vadd.f32 0.0, %v1083
      %v1085 = vpop.f32.mrb[0].mxu0
      %1086 = vdwg.mxu0
      %v1088 = vsel %vm798, %v993, 0
      %1090 = vmatprep.subr.mxu0 0.0
      %1091 = vmatpush1.msra.mxu0 %v974
      %1092 = vmatprep.subr.mxu0 0.0
      %1093 = vmatpush1.msra.mxu0 %v975
      %1094 = vmatprep.subr.mxu0 0.0
      %1095 = vmatpush1.msra.mxu0 %v976
      %1096 = vmatprep.subr.mxu0 0.0
      %1097 = vmatpush1.msra.mxu0 %v977
      %1098 = vmatprep.subr.mxu0 0.0
      %1099 = vmatpush1.msra.mxu0 %v978
      %1100 = vmatprep.subr.mxu0 0.0
      %1101 = vmatpush1.msra.mxu0 %v979
      %1102 = vmatprep.subr.mxu0 0.0
      %1103 = vmatpush1.msra.mxu0 %v980
      %1104 = vmatprep.subr.mxu0 0.0
      %1105 = vmatpush1.msra.mxu0 %v981
      %1106 = vmatprep.subr.mxu0 0.0
      %1107 = vmatpush1.msra.mxu0 %v982
      %1108 = vmatprep.subr.mxu0 0.0
      %1109 = vmatpush1.msra.mxu0 %v983
      %1110 = vmatprep.subr.mxu0 0.0
      %1111 = vmatpush1.msra.mxu0 %v984
      %1112 = vmatprep.subr.mxu0 0.0
      %1113 = vmatpush1.msra.mxu0 %v985
      %1114 = vmatprep.subr.mxu0 0.0
      %1115 = vmatpush1.msra.mxu0 %v986
      %1116 = vmatprep.subr.mxu0 0.0
      %1117 = vmatpush1.msra.mxu0 %v987
      %1118 = vmatprep.subr.mxu0 0.0
      %1119 = vmatpush1.msra.mxu0 %v988
      %1120 = vmatprep.subr.mxu0 0.0
      %1121 = vmatpush1.msra.mxu0 %v989
      %1122 = vmatprep.subr.mxu0 0.0
      %1123 = vmatpush1.msra.mxu0 %v990
      %1124 = vmatprep.subr.mxu0 0.0
      %1125 = vmatpush1.msra.mxu0 %v991
      %1126 = vmatprep.subr.mxu0 0.0
      %1127 = vmatpush1.msra.mxu0 %v992
      %1128 = vmatprep.subr.mxu0 0.0
      %1129 = vmatpush1.msra.mxu0 %v1088
      %1130 = vmatprep.subr.mxu0 0.0
      %1131 = vmatpush1.msra.mxu0 0.0
      %1132 = vmatprep.subr.mxu0 0.0
      %1133 = vmatpush1.msra.mxu0 0.0
      %1134 = vmatprep.subr.mxu0 0.0
      %1135 = vmatpush1.msra.mxu0 0.0
      %1136 = vmatprep.subr.mxu0 0.0
      %1137 = vmatpush1.msra.mxu0 0.0
      %1138 = vmatprep.subr.mxu0 0.0
      %1139 = vmatpush1.msra.mxu0 0.0
      %1140 = vmatprep.subr.mxu0 0.0
      %1141 = vmatpush1.msra.mxu0 0.0
      %1142 = vmatprep.subr.mxu0 0.0
      %1143 = vmatpush1.msra.mxu0 0.0
      %1144 = vmatprep.subr.mxu0 0.0
      %1145 = vmatpush1.msra.mxu0 0.0
      %1146 = vmatprep.subr.mxu0 0.0
      %1147 = vmatpush1.msra.mxu0 0.0
      %1148 = vmatprep.subr.mxu0 0.0
      %1149 = vmatpush1.msra.mxu0 0.0
      %1150 = vmatprep.subr.mxu0 0.0
      %1151 = vmatpush1.msra.mxu0 0.0
      %1152 = vmatprep.subr.mxu0 0.0
      %1153 = vmatpush1.msra.mxu0 0.0
      %1154 = vmatprep.mubr.f32.mxu0 %v793
      %1155 = vmatmul.mubr.f32.gmra.mrb[0].mxu0 %v557
      %v1156 = vpop.f32.mrb[0].mxu0
      %v1157 = vadd.f32 %v1079, %v1156
      %v1158 = vpop.f32.mrb[0].mxu0
      %1159 = vmatprep.mubr.f32.mxu0 %v796
      %1160 = vmatmul.mubr.f32.gmra.mrb[0].mxu0 %v559
      %v1161 = vpop.f32.mrb[0].mxu0
      %v1162 = vadd.f32 %v1084, %v1161
      %v1163 = vpop.f32.mrb[0].mxu0
      %1164 = vdwg.mxu0
      %v1165 = vld [vmem:[%s11] sm:$0xff]
      %v1166 = vld [vmem:[%s11 + $0x8] sm:$0x7f]
      %v1168 = vsel %vm888, %v966, 0
      %v1171 = vsel %vm888, %v971, 0
      %v1174 = vsel %vm895, %v1166, 0
      %1176 = vmatprep.subr.mxu0 0.0
      %1177 = vmatpush1.msra.mxu0 %v1165
      %1178 = vmatprep.subr.mxu0 0.0
      %1179 = vmatpush1.msra.mxu0 %v1174
      %1180 = vmatprep.subr.mxu0 0.0
      %1181 = vmatpush1.msra.mxu0 0.0
      %1182 = vmatprep.subr.mxu0 0.0
      %1183 = vmatpush1.msra.mxu0 0.0
      %1184 = vmatprep.subr.mxu0 0.0
      %1185 = vmatpush1.msra.mxu0 0.0
      %1186 = vmatprep.subr.mxu0 0.0
      %1187 = vmatpush1.msra.mxu0 0.0
      %1188 = vmatprep.subr.mxu0 0.0
      %1189 = vmatpush1.msra.mxu0 0.0
      %1190 = vmatprep.subr.mxu0 0.0
      %1191 = vmatpush1.msra.mxu0 0.0
      %1192 = vmatprep.subr.mxu0 0.0
      %1193 = vmatpush1.msra.mxu0 0.0
      %1194 = vmatprep.subr.mxu0 0.0
      %1195 = vmatpush1.msra.mxu0 0.0
      %1196 = vmatprep.subr.mxu0 0.0
      %1197 = vmatpush1.msra.mxu0 0.0
      %1198 = vmatprep.subr.mxu0 0.0
      %1199 = vmatpush1.msra.mxu0 0.0
      %1200 = vmatprep.subr.mxu0 0.0
      %1201 = vmatpush1.msra.mxu0 0.0
      %1202 = vmatprep.subr.mxu0 0.0
      %1203 = vmatpush1.msra.mxu0 0.0
      %1204 = vmatprep.subr.mxu0 0.0
      %1205 = vmatpush1.msra.mxu0 0.0
      %1206 = vmatprep.subr.mxu0 0.0
      %1207 = vmatpush1.msra.mxu0 0.0
      %1208 = vmatprep.subr.mxu0 0.0
      %1209 = vmatpush1.msra.mxu0 0.0
      %1210 = vmatprep.subr.mxu0 0.0
      %1211 = vmatpush1.msra.mxu0 0.0
      %1212 = vmatprep.subr.mxu0 0.0
      %1213 = vmatpush1.msra.mxu0 0.0
      %1214 = vmatprep.subr.mxu0 0.0
      %1215 = vmatpush1.msra.mxu0 0.0
      %1216 = vmatprep.subr.mxu0 0.0
      %1217 = vmatpush1.msra.mxu0 0.0
      %1218 = vmatprep.subr.mxu0 0.0
      %1219 = vmatpush1.msra.mxu0 0.0
      %1220 = vmatprep.subr.mxu0 0.0
      %1221 = vmatpush1.msra.mxu0 0.0
      %1222 = vmatprep.subr.mxu0 0.0
      %1223 = vmatpush1.msra.mxu0 0.0
      %1224 = vmatprep.subr.mxu0 0.0
      %1225 = vmatpush1.msra.mxu0 0.0
      %1226 = vmatprep.subr.mxu0 0.0
      %1227 = vmatpush1.msra.mxu0 0.0
      %1228 = vmatprep.subr.mxu0 0.0
      %1229 = vmatpush1.msra.mxu0 0.0
      %1230 = vmatprep.subr.mxu0 0.0
      %1231 = vmatpush1.msra.mxu0 0.0
      %1232 = vmatprep.subr.mxu0 0.0
      %1233 = vmatpush1.msra.mxu0 0.0
      %1234 = vmatprep.subr.mxu0 0.0
      %1235 = vmatpush1.msra.mxu0 0.0
      %1236 = vmatprep.subr.mxu0 0.0
      %1237 = vmatpush1.msra.mxu0 0.0
      %1238 = vmatprep.subr.mxu0 0.0
      %1239 = vmatpush1.msra.mxu0 0.0
      %1240 = vmatprep.mubr.f32.mxu0 0.0
      %1241 = vmatmul.mubr.f32.gmra.mrb[0].mxu0 %v1168
      %v1242 = vpop.f32.mrb[0].mxu0
      %v1243 = vadd.f32 0.0, %v1242
      %v1244 = vpop.f32.mrb[0].mxu0
      %1245 = vmatprep.mubr.f32.mxu0 0.0
      %1246 = vmatmul.mubr.f32.gmra.mrb[0].mxu0 %v1171
      %v1247 = vpop.f32.mrb[0].mxu0
      %v1248 = vadd.f32 0.0, %v1247
      %v1249 = vpop.f32.mrb[0].mxu0
      %1250 = vdwg.mxu0
      %v1251 = vadd.f32 %v1157, %v1243
      %v1252 = vadd.f32 %v1162, %v1248
      %v1253 = vld [vmem:[%s12] sm:$0x1]
      %v1255 = vlaneseq
      %v1256 = vshrl.u32 %v1255, 7
      %v1257 = vsub.s32 0, %v1256
      %v1258 = vrot.slane %v1253, %v1257
      %v1260 = vadd.f32 %v1251, %v1258
      %v1261 = vadd.f32 %v1252, %v1258
      %v1262 = vmax.f32 %v1260, 0.0
      %v1263 = vmax.f32 %v1261, 0.0
      %v1264 = vld [vmem:[%s13] sm:$0xff]
      %v1265 = vld [vmem:[%s13 + $0x8] sm:$0xff]
      %v1266 = vld [vmem:[%s13 + $0x10] sm:$0xff]
      %v1267 = vld [vmem:[%s13 + $0x18] sm:$0xff]
      %v1268 = vld [vmem:[%s13 + $0x20] sm:$0xff]
      %v1269 = vld [vmem:[%s13 + $0x28] sm:$0xff]
      %v1270 = vld [vmem:[%s13 + $0x30] sm:$0xff]
      %v1271 = vld [vmem:[%s13 + $0x38] sm:$0xff]
      %v1272 = vld [vmem:[%s13 + $0x40] sm:$0xff]
      %v1273 = vld [vmem:[%s13 + $0x48] sm:$0xff]
      %v1274 = vld [vmem:[%s13 + $0x50] sm:$0xff]
      %v1275 = vld [vmem:[%s13 + $0x58] sm:$0xff]
      %v1276 = vld [vmem:[%s14] sm:$0x1]
      %v1278 = vlaneseq
      %v1279 = vshrl.u32 %v1278, 7
      %v1280 = vsub.s32 0, %v1279
      %v1281 = vrot.slane %v1276, %v1280
      %v1284 = vsel %vm580, %v1262, 0
      %v1287 = vsel %vm580, %v1263, 0
      %1289 = vmatprep.subr.mxu0 0.0
      %1290 = vmatpush1.msra.mxu0 %v1264
      %1291 = vmatprep.subr.mxu0 0.0
      %1292 = vmatpush1.msra.mxu0 %v1265
      %1293 = vmatprep.subr.mxu0 0.0
      %1294 = vmatpush1.msra.mxu0 %v1266
      %1295 = vmatprep.subr.mxu0 0.0
      %1296 = vmatpush1.msra.mxu0 %v1267
      %1297 = vmatprep.subr.mxu0 0.0
      %1298 = vmatpush1.msra.mxu0 %v1268
      %1299 = vmatprep.subr.mxu0 0.0
      %1300 = vmatpush1.msra.mxu0 %v1269
      %1301 = vmatprep.subr.mxu0 0.0
      %1302 = vmatpush1.msra.mxu0 %v1270
      %1303 = vmatprep.subr.mxu0 0.0
      %1304 = vmatpush1.msra.mxu0 %v1271
      %1305 = vmatprep.subr.mxu0 0.0
      %1306 = vmatpush1.msra.mxu0 %v1272
      %1307 = vmatprep.subr.mxu0 0.0
      %1308 = vmatpush1.msra.mxu0 %v1273
      %1309 = vmatprep.subr.mxu0 0.0
      %1310 = vmatpush1.msra.mxu0 %v1274
      %1311 = vmatprep.subr.mxu0 0.0
      %1312 = vmatpush1.msra.mxu0 %v1275
      %1313 = vmatprep.subr.mxu0 0.0
      %1314 = vmatpush1.msra.mxu0 0.0
      %1315 = vmatprep.subr.mxu0 0.0
      %1316 = vmatpush1.msra.mxu0 0.0
      %1317 = vmatprep.subr.mxu0 0.0
      %1318 = vmatpush1.msra.mxu0 0.0
      %1319 = vmatprep.subr.mxu0 0.0
      %1320 = vmatpush1.msra.mxu0 0.0
      %1321 = vmatprep.subr.mxu0 0.0
      %1322 = vmatpush1.msra.mxu0 0.0
      %1323 = vmatprep.subr.mxu0 0.0
      %1324 = vmatpush1.msra.mxu0 0.0
      %1325 = vmatprep.subr.mxu0 0.0
      %1326 = vmatpush1.msra.mxu0 0.0
      %1327 = vmatprep.subr.mxu0 0.0
      %1328 = vmatpush1.msra.mxu0 0.0
      %1329 = vmatprep.subr.mxu0 0.0
      %1330 = vmatpush1.msra.mxu0 0.0
      %1331 = vmatprep.subr.mxu0 0.0
      %1332 = vmatpush1.msra.mxu0 0.0
      %1333 = vmatprep.subr.mxu0 0.0
      %1334 = vmatpush1.msra.mxu0 0.0
      %1335 = vmatprep.subr.mxu0 0.0
      %1336 = vmatpush1.msra.mxu0 0.0
      %1337 = vmatprep.subr.mxu0 0.0
      %1338 = vmatpush1.msra.mxu0 0.0
      %1339 = vmatprep.subr.mxu0 0.0
      %1340 = vmatpush1.msra.mxu0 0.0
      %1341 = vmatprep.subr.mxu0 0.0
      %1342 = vmatpush1.msra.mxu0 0.0
      %1343 = vmatprep.subr.mxu0 0.0
      %1344 = vmatpush1.msra.mxu0 0.0
      %1345 = vmatprep.subr.mxu0 0.0
      %1346 = vmatpush1.msra.mxu0 0.0
      %1347 = vmatprep.subr.mxu0 0.0
      %1348 = vmatpush1.msra.mxu0 0.0
      %1349 = vmatprep.subr.mxu0 0.0
      %1350 = vmatpush1.msra.mxu0 0.0
      %1351 = vmatprep.subr.mxu0 0.0
      %1352 = vmatpush1.msra.mxu0 0.0
      %1353 = vmatprep.mubr.f32.mxu0 0.0
      %1354 = vmatmul.mubr.f32.gmra.mrb[0].mxu0 %v1284
      %v1355 = vpop.f32.mrb[0].mxu0
      %v1356 = vadd.f32 %v1281, %v1355
      %v1357 = vpop.f32.mrb[0].mxu0
      %1358 = vmatprep.mubr.f32.mxu0 0.0
      %1359 = vmatmul.mubr.f32.gmra.mrb[0].mxu0 %v1287
      %v1360 = vpop.f32.mrb[0].mxu0
      %v1361 = vadd.f32 %v1281, %v1360
      %v1362 = vpop.f32.mrb[0].mxu0
      %1363 = vdwg.mxu0
      %v1364 = vmax.f32 %v1356, 0.0
      %v1365 = vmax.f32 %v1361, 0.0
      %v1366 = vld [vmem:[%s15] sm:$0xff]
      %v1367 = vld [vmem:[%s15 + $0x8] sm:$0xff]
      %v1368 = vld [vmem:[%s15 + $0x10] sm:$0xff]
      %v1369 = vld [vmem:[%s15 + $0x18] sm:$0xff]
      %v1370 = vld [vmem:[%s15 + $0x20] sm:$0xff]
      %v1371 = vld [vmem:[%s15 + $0x28] sm:$0xff]
      %v1372 = vld [vmem:[%s15 + $0x30] sm:$0xff]
      %v1373 = vld [vmem:[%s15 + $0x38] sm:$0xff]
      %v1374 = vld [vmem:[%s15 + $0x40] sm:$0xff]
      %v1375 = vld [vmem:[%s15 + $0x48] sm:$0xff]
      %v1376 = vld [vmem:[%s15 + $0x50] sm:$0xff]
      %v1377 = vld [vmem:[%s15 + $0x58] sm:$0xff]
      %v1378 = vld [vmem:[%s16] sm:$0x1]
      %v1380 = vlaneseq
      %v1381 = vshrl.u32 %v1380, 7
      %v1382 = vsub.s32 0, %v1381
      %v1383 = vrot.slane %v1378, %v1382
      %v1386 = vsel %vm580, %v1364, 0
      %v1389 = vsel %vm580, %v1365, 0
      %1391 = vmatprep.subr.mxu0 0.0
      %1392 = vmatpush1.msra.mxu0 %v1366
      %1393 = vmatprep.subr.mxu0 0.0
      %1394 = vmatpush1.msra.mxu0 %v1367
      %1395 = vmatprep.subr.mxu0 0.0
      %1396 = vmatpush1.msra.mxu0 %v1368
      %1397 = vmatprep.subr.mxu0 0.0
      %1398 = vmatpush1.msra.mxu0 %v1369
      %1399 = vmatprep.subr.mxu0 0.0
      %1400 = vmatpush1.msra.mxu0 %v1370
      %1401 = vmatprep.subr.mxu0 0.0
      %1402 = vmatpush1.msra.mxu0 %v1371
      %1403 = vmatprep.subr.mxu0 0.0
      %1404 = vmatpush1.msra.mxu0 %v1372
      %1405 = vmatprep.subr.mxu0 0.0
      %1406 = vmatpush1.msra.mxu0 %v1373
      %1407 = vmatprep.subr.mxu0 0.0
      %1408 = vmatpush1.msra.mxu0 %v1374
      %1409 = vmatprep.subr.mxu0 0.0
      %1410 = vmatpush1.msra.mxu0 %v1375
      %1411 = vmatprep.subr.mxu0 0.0
      %1412 = vmatpush1.msra.mxu0 %v1376
      %1413 = vmatprep.subr.mxu0 0.0
      %1414 = vmatpush1.msra.mxu0 %v1377
      %1415 = vmatprep.subr.mxu0 0.0
      %1416 = vmatpush1.msra.mxu0 0.0
      %1417 = vmatprep.subr.mxu0 0.0
      %1418 = vmatpush1.msra.mxu0 0.0
      %1419 = vmatprep.subr.mxu0 0.0
      %1420 = vmatpush1.msra.mxu0 0.0
      %1421 = vmatprep.subr.mxu0 0.0
      %1422 = vmatpush1.msra.mxu0 0.0
      %1423 = vmatprep.subr.mxu0 0.0
      %1424 = vmatpush1.msra.mxu0 0.0
      %1425 = vmatprep.subr.mxu0 0.0
      %1426 = vmatpush1.msra.mxu0 0.0
      %1427 = vmatprep.subr.mxu0 0.0
      %1428 = vmatpush1.msra.mxu0 0.0
      %1429 = vmatprep.subr.mxu0 0.0
      %1430 = vmatpush1.msra.mxu0 0.0
      %1431 = vmatprep.subr.mxu0 0.0
      %1432 = vmatpush1.msra.mxu0 0.0
      %1433 = vmatprep.subr.mxu0 0.0
      %1434 = vmatpush1.msra.mxu0 0.0
      %1435 = vmatprep.subr.mxu0 0.0
      %1436 = vmatpush1.msra.mxu0 0.0
      %1437 = vmatprep.subr.mxu0 0.0
      %1438 = vmatpush1.msra.mxu0 0.0
      %1439 = vmatprep.subr.mxu0 0.0
      %1440 = vmatpush1.msra.mxu0 0.0
      %1441 = vmatprep.subr.mxu0 0.0
      %1442 = vmatpush1.msra.mxu0 0.0
      %1443 = vmatprep.subr.mxu0 0.0
      %1444 = vmatpush1.msra.mxu0 0.0
      %1445 = vmatprep.subr.mxu0 0.0
      %1446 = vmatpush1.msra.mxu0 0.0
      %1447 = vmatprep.subr.mxu0 0.0
      %1448 = vmatpush1.msra.mxu0 0.0
      %1449 = vmatprep.subr.mxu0 0.0
      %1450 = vmatpush1.msra.mxu0 0.0
      %1451 = vmatprep.subr.mxu0 0.0
      %1452 = vmatpush1.msra.mxu0 0.0
      %1453 = vmatprep.subr.mxu0 0.0
      %1454 = vmatpush1.msra.mxu0 0.0
      %1455 = vmatprep.mubr.f32.mxu0 0.0
      %1456 = vmatmul.mubr.f32.gmra.mrb[0].mxu0 %v1386
      %v1457 = vpop.f32.mrb[0].mxu0
      %v1458 = vadd.f32 %v1383, %v1457
      %v1459 = vpop.f32.mrb[0].mxu0
      %1460 = vmatprep.mubr.f32.mxu0 0.0
      %1461 = vmatmul.mubr.f32.gmra.mrb[0].mxu0 %v1389
      %v1462 = vpop.f32.mrb[0].mxu0
      %v1463 = vadd.f32 %v1383, %v1462
      %v1464 = vpop.f32.mrb[0].mxu0
      %1465 = vdwg.mxu0
      %1466 = vst.msk [vmem:[%s553] sm:$0xff] %vm888, %v1458
      %1467 = vst.msk [vmem:[%s553 + $0x8] sm:$0xff] %vm888, %v1463
      %s1468 = smul.u32 2, %s28
      %p1469 = scmp.lt.s32.totalorder %s1468, 3
      %s1470 = scalar_select %p1469, %s1468, 3
      %s1471 = smul.addr %s1470, 8
      %s1472 = scalar_lea.vmem %s17, %s1471
      // Predicated region
      $region89: #{qtran_qalt_forward.1} parent=87 // pred_check
        %p1473 = pneg %p408
      $region90: #{qtran_qalt_forward.1} parent=87 // pred_check_branch
        %1475 = sbr.rel (%p1473) target = $region92
      $region91: #{qtran_qalt_forward.1} parent=87 // pred_region
        %s1476 = smul.u32 2, %s28
      $region92: #{qtran_qalt_forward.1} parent=87 // pred_fallthru
        _
    $region88: #{qtran_qalt_forward.1} parent=5 // pred_fallthru
      _
    %p1477 = scmp.le.s32.totalorder 2, %s23
    // Predicated region
    $region93: #{qtran_qalt_forward.1} parent=5 // pred_check
      %p1478 = pneg %p1477
    $region94: #{qtran_qalt_forward.1} parent=5 // pred_check_branch
      %1480 = sbr.rel (%p1478) target = $region96
    $region95: #{qtran_qalt_forward.1} parent=5 // pred_region
      %s1481 = ssub.s32 %s23, 2
      // Predicated region
      $region97: #{qtran_qalt_forward.1} parent=95 // pred_check
        %p1482 = pneg %p414
      $region98: #{qtran_qalt_forward.1} parent=95 // pred_check_branch
        %1484 = sbr.rel (%p1482) target = $region100
      $region99: #{qtran_qalt_forward.1} parent=95 // pred_region
        %s1485 = smul.u32 2, %s29
        %p1486 = scmp.lt.s32.totalorder %s1485, 3
        %s1487 = scalar_select %p1486, %s1485, 3
        %s1488 = smul.addr %s1487, 8
        %s1489 = scalar_lea.vmem %s17, %s1488
      $region100: #{qtran_qalt_forward.1} parent=95 // pred_fallthru
        _
    $region96: #{qtran_qalt_forward.1} parent=5 // pred_fallthru
      _
  $region6: #{qtran_qalt_forward.1} parent=0 // loop_footer
    %s27 = sadd.s32 1, %s23
  $region7: #{qtran_qalt_forward.1} parent=0 // loop_footer_branch
    %22 = sbr.rel target = $region3
  $region8: #{qtran_qalt_forward.1} parent=0 // loop_exit
    _

</llo_original>
